<compile_context>
chip_gen: v5e
topology: v5e:2x2
jax: 0.10.0
libtpu: 0.0.40
codegen_flags: <defaults>
</compile_context>

<pallas_src>
import functools
import math

import jax
import jax.numpy as jnp
import numpy as np
from jax.experimental import pallas as pl
from jax.experimental.pallas import tpu as pltpu

_MASK_VALUE = -1e30  # large-negative finite value for the causal mask


def mha_pro_kernel(x_ref, tshift_ref, wqkv_ref, bqkv_ref, rot_ref, cos_ref,
                   sin_ref, watt_ref, mix_ref, wout_ref, bout_ref, gamma_ref,
                   o_ref, *, n_head, scale, compute_dtype):
    _, T, C = x_ref.shape
    A = rot_ref.shape[0]          # n_attn
    hs = A // n_head              # head_size
    half = C // 2
    cd = compute_dtype

    x = x_ref[0]                                            # (T, C) f32

    # --- fused half-channel time shift: shifted[t] = x[t-1], shifted[0] = 0 ---
    shifted = jnp.dot(tshift_ref[...].astype(cd), x.astype(cd),
                      preferred_element_type=jnp.float32)   # (T, C)
    col = jax.lax.broadcasted_iota(jnp.int32, (T, C), 1)
    x_mix = jnp.where(col < half, shifted, x)

    # --- packed QKV projection: one wide MXU matmul ---
    qkv = jnp.dot(x_mix.astype(cd), wqkv_ref[...].astype(cd),
                  preferred_element_type=jnp.float32) + bqkv_ref[...]
    q = qkv[:, :A]
    k = qkv[:, A:2 * A]
    v = qkv[:, 2 * A:]

    # --- rotary embedding in flat (T, A) layout: q*cos + (q @ R)*sin ---
    cosf = cos_ref[...]                                     # (T, A)
    sinf = sin_ref[...]                                     # (T, A)
    rmat = rot_ref[...].astype(cd)                          # (A, A)
    q = q * cosf + jnp.dot(q.astype(cd), rmat,
                           preferred_element_type=jnp.float32) * sinf
    k = k * cosf + jnp.dot(k.astype(cd), rmat,
                           preferred_element_type=jnp.float32) * sinf

    # --- per-head causal softmax attention scaled by the RWKV time weights ---
    row_t = jax.lax.broadcasted_iota(jnp.int32, (T, T), 0)
    col_t = jax.lax.broadcasted_iota(jnp.int32, (T, T), 1)
    causal = row_t >= col_t

    att = []
    for h in range(n_head):
        qh = q[:, h * hs:(h + 1) * hs].astype(cd)
        kh = k[:, h * hs:(h + 1) * hs].astype(cd)
        s = jax.lax.dot_general(qh, kh, (((1,), (1,)), ((), ())),
                                preferred_element_type=jnp.float32) * scale
        s = jnp.where(causal, s, _MASK_VALUE)
        s = s - jnp.max(s, axis=-1, keepdims=True)
        p = jnp.exp(s)
        p = p / jnp.sum(p, axis=-1, keepdims=True)
        att.append(p * watt_ref[h])                         # (T, T)

    # --- 1x1-conv head mix, att @ v, output projection, time_gamma scale ---
    mixw = mix_ref[...]                                     # (H, H)
    outs = []
    for g in range(n_head):
        mixed = att[0] * mixw[g:g + 1, 0:1]
        for h in range(1, n_head):
            mixed = mixed + att[h] * mixw[g:g + 1, h:h + 1]
        vg = v[:, g * hs:(g + 1) * hs].astype(cd)
        outs.append(jnp.dot(mixed.astype(cd), vg,
                            preferred_element_type=jnp.float32))
    y = jnp.concatenate(outs, axis=-1)                      # (T, A)

    out = jnp.dot(y.astype(cd), wout_ref[...].astype(cd),
                  preferred_element_type=jnp.float32)
    out = (out + bout_ref[...]) * gamma_ref[...]
    o_ref[0] = out.astype(o_ref.dtype)


def _build_time_weights(params, T):
    """Faithful port of the torch time_w band construction -> (H, T, T)."""
    time_w = params["time_w"]                    # (H, TT)
    H, TT = time_w.shape
    w = jnp.pad(time_w, ((0, 0), (0, TT)))       # (H, 2TT)
    w = jnp.tile(w, (1, TT))                     # (H, 2TT*TT)
    w = w[:, :-TT].reshape(H, TT, 2 * TT - 1)
    w = w[:, :, TT - 1:]                         # (H, TT, TT)
    return (w[:, :T, :T]
            * params["time_alpha"][:, :, :T]
            * params["time_beta"][:, :T, :])


def _build_rotary_tables(T, n_head, head_size):
    """cos/sin tables widened to (T, A) + block-diagonal rotate-half matrix."""
    rot = int(head_size * 0.5)
    inv_freq = 1.0 / (10000.0 ** (np.arange(0, rot, 2, dtype=np.float32) / rot))
    t = np.arange(T, dtype=np.float32)
    freqs = np.outer(t, inv_freq)                        # (T, rot//2)
    emb = np.concatenate([freqs, freqs], axis=-1)        # (T, rot)
    cos_e, sin_e = np.cos(emb), np.sin(emb)
    pad_c = np.ones((T, head_size - rot), np.float32)    # pass-through dims
    pad_s = np.zeros((T, head_size - rot), np.float32)
    cosf = np.tile(np.concatenate([cos_e, pad_c], -1), (1, n_head))  # (T, A)
    sinf = np.tile(np.concatenate([sin_e, pad_s], -1), (1, n_head))  # (T, A)

    A = n_head * head_size
    R = np.zeros((A, A), np.float32)
    hr = rot // 2
    for h in range(n_head):
        base = h * head_size
        for j in range(hr):
            R[base + j + hr, base + j] = -1.0            # -x2 -> first half
            R[base + j, base + j + hr] = 1.0             #  x1 -> second half
    return jnp.asarray(cosf), jnp.asarray(sinf), jnp.asarray(R)


def mha_pro_forward(x, params, *, n_head, compute_dtype=jnp.float32,
                    interpret=False):
    B, T, C = x.shape
    A = params["wq"].shape[1]
    hs = A // n_head
    scale = 1.0 / math.sqrt(hs)

    wqkv = jnp.concatenate([params["wq"], params["wk"], params["wv"]], axis=1)
    bqkv = jnp.concatenate([params["bq"], params["bk"], params["bv"]], axis=1)

    cosf, sinf, rmat = _build_rotary_tables(T, n_head, hs)
    watt = _build_time_weights(params, T)                     # (H, T, T)
    gamma = params["time_gamma"][:T, :]                       # (T, 1)

    # time-shift matrix: (S @ x)[t] = x[t-1], (S @ x)[0] = 0
    tshift = jnp.asarray(np.eye(T, k=-1, dtype=np.float32))   # (T, T)

    full2 = lambda shape: pl.BlockSpec(shape, lambda b: (0, 0))
    full3 = lambda shape: pl.BlockSpec(shape, lambda b: (0, 0, 0))

    kernel = functools.partial(mha_pro_kernel, n_head=n_head, scale=scale,
                               compute_dtype=compute_dtype)

    return pl.pallas_call(
        kernel,
        out_shape=jax.ShapeDtypeStruct((B, T, C), x.dtype),
        grid_spec=pltpu.PrefetchScalarGridSpec(
            num_scalar_prefetch=0,
            grid=(B,),
            in_specs=[
                pl.BlockSpec((1, T, C), lambda b: (b, 0, 0)),   # x
                full2((T, T)),                                  # time-shift matrix
                full2((C, 3 * A)), full2((1, 3 * A)),           # packed QKV
                full2((A, A)),                                  # rotate-half matrix
                full2((T, A)), full2((T, A)),                   # cos / sin tables
                full3((n_head, T, T)),                          # RWKV time weights
                full2((n_head, n_head)),                        # head-mix (1x1 conv)
                full2((A, C)), full2((1, C)),                   # output projection
                full2((T, 1)),                                  # time_gamma
            ],
            out_specs=pl.BlockSpec((1, T, C), lambda b: (b, 0, 0)),
        ),
        compiler_params=pltpu.CompilerParams(
            dimension_semantics=("parallel",),
            vmem_limit_bytes=32 * 1024 * 1024),
        interpret=interpret,
    )(x, tshift, wqkv, bqkv, rmat, cosf, sinf, watt,
      params["mix_w"], params["wout"], params["bout"], gamma)


def reference_mha_pro(x, params, *, n_head):
    """Pure-JAX port of MHA_pro.forward for validation."""
    B, T, C = x.shape
    A = params["wq"].shape[1]
    hs = A // n_head
    rot = int(hs * 0.5)
    half = C // 2

    shifted = jnp.pad(x[:, :, :half], ((0, 0), (1, 0), (0, 0)))[:, :T, :]
    xs = jnp.concatenate([shifted, x[:, :, half:]], axis=-1)

    def proj(w, b):
        y = xs @ w + b
        return y.reshape(B, T, n_head, hs).transpose(0, 2, 1, 3)   # (B,H,T,hs)

    q = proj(params["wq"], params["bq"])
    k = proj(params["wk"], params["bk"])
    v = proj(params["wv"], params["bv"])

    q_r, q_p = q[..., :rot], q[..., rot:]
    k_r, k_p = k[..., :rot], k[..., rot:]
    inv_freq = 1.0 / (10000.0 ** (jnp.arange(0, rot, 2, dtype=jnp.float32) / rot))
    t = jnp.arange(T, dtype=jnp.float32)
    freqs = jnp.outer(t, inv_freq)
    emb = jnp.concatenate([freqs, freqs], axis=-1)
    cos_e, sin_e = jnp.cos(emb), jnp.sin(emb)

    def rot_half(u):
        u1, u2 = u[..., :u.shape[-1] // 2], u[..., u.shape[-1] // 2:]
        return jnp.concatenate([-u2, u1], axis=-1)

    q_r = q_r * cos_e + rot_half(q_r) * sin_e
    k_r = k_r * cos_e + rot_half(k_r) * sin_e
    q = jnp.concatenate([q_r, q_p], axis=-1)
    k = jnp.concatenate([k_r, k_p], axis=-1)

    att = jnp.einsum("bhtd,bhsd->bhts", q, k) / math.sqrt(hs)
    causal = jnp.tril(jnp.ones((T, T), bool))
    att = jnp.where(causal, att, _MASK_VALUE)
    att = jax.nn.softmax(att, axis=-1)
    att = att * _build_time_weights(params, T)[None]
    att = jnp.einsum("gh,bhts->bgts", params["mix_w"], att)
    y = jnp.einsum("bhts,bhsd->bhtd", att, v)
    y = y.transpose(0, 2, 1, 3).reshape(B, T, A)
    return (y @ params["wout"] + params["bout"]) * params["time_gamma"][:T, :]


def init_params(key, n_embd, n_attn, n_head, ctx_len):
    ks = jax.random.split(key, 13)
    si = 1.0 / math.sqrt(n_embd)
    sa = 1.0 / math.sqrt(n_attn)
    U = lambda k, shape, s: jax.random.uniform(k, shape, jnp.float32, -s, s)
    return {
        # Linear weights stored transposed: (in_features, out_features)
        "wq": U(ks[0], (n_embd, n_attn), si), "bq": U(ks[1], (1, n_attn), si),
        "wk": U(ks[2], (n_embd, n_attn), si), "bk": U(ks[3], (1, n_attn), si),
        "wv": U(ks[4], (n_embd, n_attn), si), "bv": U(ks[5], (1, n_attn), si),
        "wout": U(ks[6], (n_attn, n_embd), sa), "bout": U(ks[7], (1, n_embd), sa),
        # 1x1 Conv2d over heads, squeezed to (out_head, in_head)
        "mix_w": U(ks[8], (n_head, n_head), 1.0 / math.sqrt(n_head)),
        # torch initializes these to ones; perturb so the test exercises them
        "time_w": 1.0 + 0.1 * jax.random.normal(ks[9], (n_head, ctx_len)),
        "time_alpha": 1.0 + 0.1 * jax.random.normal(ks[10], (n_head, 1, ctx_len)),
        "time_beta": 1.0 + 0.1 * jax.random.normal(ks[11], (n_head, ctx_len, 1)),
        "time_gamma": 1.0 + 0.1 * jax.random.normal(ks[12], (ctx_len, 1)),
    }


if __name__ == "__main__":
    B, T = 2, 8                    # batch, sequence length (= ctx_len)
    n_embd, n_attn, n_head = 32, 32, 4
    ctx_len = T

    key = jax.random.PRNGKey(0)
    kx, kp = jax.random.split(key)
    x = jax.random.normal(kx, (B, T, n_embd), jnp.float32)
    params = init_params(kp, n_embd, n_attn, n_head, ctx_len)

    out = jax.block_until_ready(mha_pro_forward(x, params, n_head=n_head))
    ref = reference_mha_pro(x, params, n_head=n_head)

    assert out.shape == (B, T, n_embd)
    err = jnp.max(jnp.abs(out - ref))
    assert jnp.allclose(out, ref, atol=1e-4, rtol=1e-4), (
        f"mismatch vs reference: max abs err {err:.3e}")
    print("KERNEL_OK")
</pallas_src>

<mosaic_0001>
module attributes {stable_mosaic.version = 11 : i64} {
  func.func @mha_pro_kernel(%arg0: i32, %arg1: memref<1x8x32xf32, #tpu.memory_space<vmem>>, %arg2: memref<8x8xf32, #tpu.memory_space<vmem>>, %arg3: memref<32x96xf32, #tpu.memory_space<vmem>>, %arg4: memref<1x96xf32, #tpu.memory_space<vmem>>, %arg5: memref<32x32xf32, #tpu.memory_space<vmem>>, %arg6: memref<8x32xf32, #tpu.memory_space<vmem>>, %arg7: memref<8x32xf32, #tpu.memory_space<vmem>>, %arg8: memref<4x8x8xf32, #tpu.memory_space<vmem>>, %arg9: memref<4x4xf32, #tpu.memory_space<vmem>>, %arg10: memref<32x32xf32, #tpu.memory_space<vmem>>, %arg11: memref<1x32xf32, #tpu.memory_space<vmem>>, %arg12: memref<8x1xf32, #tpu.memory_space<vmem>>, %arg13: memref<1x8x32xf32, #tpu.memory_space<vmem>>) attributes {dimension_semantics = [#tpu.dimension_semantics<parallel>], iteration_bounds = array<i64: 2>, scalar_prefetch = 0 : i64, scratch_operands = 0 : i64, tpu.core_type = #tpu.core_type<tc>, window_params = [{transform_indices = @transform_0, window_bounds = array<i64: 1, 8, 32>}, {pipeline_mode = #tpu.pipeline_mode<synchronous>, transform_indices = @transform_1, window_bounds = array<i64: 8, 8>}, {pipeline_mode = #tpu.pipeline_mode<synchronous>, transform_indices = @transform_2, window_bounds = array<i64: 32, 96>}, {pipeline_mode = #tpu.pipeline_mode<synchronous>, transform_indices = @transform_3, window_bounds = array<i64: 1, 96>}, {pipeline_mode = #tpu.pipeline_mode<synchronous>, transform_indices = @transform_4, window_bounds = array<i64: 32, 32>}, {pipeline_mode = #tpu.pipeline_mode<synchronous>, transform_indices = @transform_5, window_bounds = array<i64: 8, 32>}, {pipeline_mode = #tpu.pipeline_mode<synchronous>, transform_indices = @transform_6, window_bounds = array<i64: 8, 32>}, {pipeline_mode = #tpu.pipeline_mode<synchronous>, transform_indices = @transform_7, window_bounds = array<i64: 4, 8, 8>}, {pipeline_mode = #tpu.pipeline_mode<synchronous>, transform_indices = @transform_8, window_bounds = array<i64: 4, 4>}, {pipeline_mode = #tpu.pipeline_mode<synchronous>, transform_indices = @transform_9, window_bounds = array<i64: 32, 32>}, {pipeline_mode = #tpu.pipeline_mode<synchronous>, transform_indices = @transform_10, window_bounds = array<i64: 1, 32>}, {pipeline_mode = #tpu.pipeline_mode<synchronous>, transform_indices = @transform_11, window_bounds = array<i64: 8, 1>}, {transform_indices = @transform_12, window_bounds = array<i64: 1, 8, 32>}]} {
    %c0 = arith.constant 0 : index
    %c0_0 = arith.constant 0 : index
    %c0_1 = arith.constant 0 : index
    %0 = vector.load %arg1[%c0, %c0_0, %c0_1] : memref<1x8x32xf32, #tpu.memory_space<vmem>>, vector<1x8x32xf32>
    %1 = vector.shape_cast %0 : vector<1x8x32xf32> to vector<8x32xf32>
    %c0_2 = arith.constant 0 : index
    %c0_3 = arith.constant 0 : index
    %2 = vector.load %arg2[%c0_2, %c0_3] : memref<8x8xf32, #tpu.memory_space<vmem>>, vector<8x8xf32>
    %cst = arith.constant dense<0.000000e+00> : vector<8x32xf32>
    %3 = tpu.matmul %2, %1, %cst {dimension_numbers = #tpu.dot_dimension_numbers<[1], [0], [0], [1], [0, 0, 1, 1], [], []>} : vector<8x8xf32>, vector<8x32xf32>, vector<8x32xf32> -> vector<8x32xf32>
    %4 = tpu.iota {dimensions = array<i32: 1>} : vector<8x32xi32>
    %c16_i32 = arith.constant 16 : i32
    %5 = vector.broadcast %c16_i32 : i32 to vector<8x32xi32>
    %6 = arith.cmpi slt, %4, %5 : vector<8x32xi32>
    %7 = arith.select %6, %3, %1 : vector<8x32xi1>, vector<8x32xf32>
    %c0_4 = arith.constant 0 : index
    %c0_5 = arith.constant 0 : index
    %8 = vector.load %arg3[%c0_4, %c0_5] : memref<32x96xf32, #tpu.memory_space<vmem>>, vector<32x96xf32>
    %cst_6 = arith.constant dense<0.000000e+00> : vector<8x96xf32>
    %9 = tpu.matmul %7, %8, %cst_6 {dimension_numbers = #tpu.dot_dimension_numbers<[1], [0], [0], [1], [0, 0, 1, 1], [], []>} : vector<8x32xf32>, vector<32x96xf32>, vector<8x96xf32> -> vector<8x96xf32>
    %c0_7 = arith.constant 0 : index
    %c0_8 = arith.constant 0 : index
    %10 = vector.load %arg4[%c0_7, %c0_8] : memref<1x96xf32, #tpu.memory_space<vmem>>, vector<1x96xf32>
    %11 = vector.broadcast %10 : vector<1x96xf32> to vector<8x96xf32>
    %12 = arith.addf %9, %11 : vector<8x96xf32>
    %13 = vector.extract_strided_slice %12 {offsets = [0, 0], sizes = [8, 32], strides = [1, 1]} : vector<8x96xf32> to vector<8x32xf32>
    %14 = vector.extract_strided_slice %12 {offsets = [0, 32], sizes = [8, 32], strides = [1, 1]} : vector<8x96xf32> to vector<8x32xf32>
    %15 = vector.extract_strided_slice %12 {offsets = [0, 64], sizes = [8, 32], strides = [1, 1]} : vector<8x96xf32> to vector<8x32xf32>
    %c0_9 = arith.constant 0 : index
    %c0_10 = arith.constant 0 : index
    %16 = vector.load %arg6[%c0_9, %c0_10] : memref<8x32xf32, #tpu.memory_space<vmem>>, vector<8x32xf32>
    %c0_11 = arith.constant 0 : index
    %c0_12 = arith.constant 0 : index
    %17 = vector.load %arg7[%c0_11, %c0_12] : memref<8x32xf32, #tpu.memory_space<vmem>>, vector<8x32xf32>
    %c0_13 = arith.constant 0 : index
    %c0_14 = arith.constant 0 : index
    %18 = vector.load %arg5[%c0_13, %c0_14] : memref<32x32xf32, #tpu.memory_space<vmem>>, vector<32x32xf32>
    %19 = arith.mulf %13, %16 : vector<8x32xf32>
    %cst_15 = arith.constant dense<0.000000e+00> : vector<8x32xf32>
    %20 = tpu.matmul %13, %18, %cst_15 {dimension_numbers = #tpu.dot_dimension_numbers<[1], [0], [0], [1], [0, 0, 1, 1], [], []>} : vector<8x32xf32>, vector<32x32xf32>, vector<8x32xf32> -> vector<8x32xf32>
    %21 = arith.mulf %20, %17 : vector<8x32xf32>
    %22 = arith.addf %19, %21 : vector<8x32xf32>
    %23 = arith.mulf %14, %16 : vector<8x32xf32>
    %cst_16 = arith.constant dense<0.000000e+00> : vector<8x32xf32>
    %24 = tpu.matmul %14, %18, %cst_16 {dimension_numbers = #tpu.dot_dimension_numbers<[1], [0], [0], [1], [0, 0, 1, 1], [], []>} : vector<8x32xf32>, vector<32x32xf32>, vector<8x32xf32> -> vector<8x32xf32>
    %25 = arith.mulf %24, %17 : vector<8x32xf32>
    %26 = arith.addf %23, %25 : vector<8x32xf32>
    %27 = tpu.iota {dimensions = array<i32: 0>} : vector<8x8xi32>
    %28 = tpu.iota {dimensions = array<i32: 1>} : vector<8x8xi32>
    %29 = arith.cmpi sge, %27, %28 : vector<8x8xi32>
    %30 = vector.extract_strided_slice %22 {offsets = [0, 0], sizes = [8, 8], strides = [1, 1]} : vector<8x32xf32> to vector<8x8xf32>
    %31 = vector.extract_strided_slice %26 {offsets = [0, 0], sizes = [8, 8], strides = [1, 1]} : vector<8x32xf32> to vector<8x8xf32>
    %cst_17 = arith.constant dense<0.000000e+00> : vector<8x8xf32>
    %32 = tpu.matmul %30, %31, %cst_17 {dimension_numbers = #tpu.dot_dimension_numbers<[1], [1], [0], [0], [0, 0, 1, 0], [], []>} : vector<8x8xf32>, vector<8x8xf32>, vector<8x8xf32> -> vector<8x8xf32>
    %cst_18 = arith.constant 0.353553385 : f32
    %33 = vector.broadcast %cst_18 : f32 to vector<8x8xf32>
    %34 = arith.mulf %32, %33 : vector<8x8xf32>
    %cst_19 = arith.constant -1.000000e+30 : f32
    %35 = vector.broadcast %cst_19 : f32 to vector<8x8xf32>
    %36 = arith.select %29, %34, %35 : vector<8x8xi1>, vector<8x8xf32>
    %cst_20 = arith.constant dense<0xFF800000> : vector<8xf32>
    %37 = vector.multi_reduction <maximumf>, %36, %cst_20 [1] : vector<8x8xf32> to vector<8xf32>
    %38 = vector.shape_cast %37 : vector<8xf32> to vector<8x1xf32>
    %39 = vector.broadcast %38 : vector<8x1xf32> to vector<8x8xf32>
    %40 = arith.subf %36, %39 : vector<8x8xf32>
    %41 = math.exp %40 : vector<8x8xf32>
    %cst_21 = arith.constant dense<0.000000e+00> : vector<8xf32>
    %42 = vector.multi_reduction <add>, %41, %cst_21 [1] : vector<8x8xf32> to vector<8xf32>
    %43 = vector.shape_cast %42 : vector<8xf32> to vector<8x1xf32>
    %44 = vector.broadcast %43 : vector<8x1xf32> to vector<8x8xf32>
    %45 = arith.divf %41, %44 : vector<8x8xf32>
    %c0_22 = arith.constant 0 : index
    %c0_23 = arith.constant 0 : index
    %c0_24 = arith.constant 0 : index
    %46 = vector.load %arg8[%c0_22, %c0_23, %c0_24] : memref<4x8x8xf32, #tpu.memory_space<vmem>>, vector<1x8x8xf32>
    %47 = vector.shape_cast %46 : vector<1x8x8xf32> to vector<8x8xf32>
    %48 = arith.mulf %45, %47 : vector<8x8xf32>
    %49 = vector.extract_strided_slice %22 {offsets = [0, 8], sizes = [8, 8], strides = [1, 1]} : vector<8x32xf32> to vector<8x8xf32>
    %50 = vector.extract_strided_slice %26 {offsets = [0, 8], sizes = [8, 8], strides = [1, 1]} : vector<8x32xf32> to vector<8x8xf32>
    %cst_25 = arith.constant dense<0.000000e+00> : vector<8x8xf32>
    %51 = tpu.matmul %49, %50, %cst_25 {dimension_numbers = #tpu.dot_dimension_numbers<[1], [1], [0], [0], [0, 0, 1, 0], [], []>} : vector<8x8xf32>, vector<8x8xf32>, vector<8x8xf32> -> vector<8x8xf32>
    %cst_26 = arith.constant 0.353553385 : f32
    %52 = vector.broadcast %cst_26 : f32 to vector<8x8xf32>
    %53 = arith.mulf %51, %52 : vector<8x8xf32>
    %cst_27 = arith.constant -1.000000e+30 : f32
    %54 = vector.broadcast %cst_27 : f32 to vector<8x8xf32>
    %55 = arith.select %29, %53, %54 : vector<8x8xi1>, vector<8x8xf32>
    %cst_28 = arith.constant dense<0xFF800000> : vector<8xf32>
    %56 = vector.multi_reduction <maximumf>, %55, %cst_28 [1] : vector<8x8xf32> to vector<8xf32>
    %57 = vector.shape_cast %56 : vector<8xf32> to vector<8x1xf32>
    %58 = vector.broadcast %57 : vector<8x1xf32> to vector<8x8xf32>
    %59 = arith.subf %55, %58 : vector<8x8xf32>
    %60 = math.exp %59 : vector<8x8xf32>
    %cst_29 = arith.constant dense<0.000000e+00> : vector<8xf32>
    %61 = vector.multi_reduction <add>, %60, %cst_29 [1] : vector<8x8xf32> to vector<8xf32>
    %62 = vector.shape_cast %61 : vector<8xf32> to vector<8x1xf32>
    %63 = vector.broadcast %62 : vector<8x1xf32> to vector<8x8xf32>
    %64 = arith.divf %60, %63 : vector<8x8xf32>
    %c1 = arith.constant 1 : index
    %c0_30 = arith.constant 0 : index
    %c0_31 = arith.constant 0 : index
    %65 = vector.load %arg8[%c1, %c0_30, %c0_31] : memref<4x8x8xf32, #tpu.memory_space<vmem>>, vector<1x8x8xf32>
    %66 = vector.shape_cast %65 : vector<1x8x8xf32> to vector<8x8xf32>
    %67 = arith.mulf %64, %66 : vector<8x8xf32>
    %68 = vector.extract_strided_slice %22 {offsets = [0, 16], sizes = [8, 8], strides = [1, 1]} : vector<8x32xf32> to vector<8x8xf32>
    %69 = vector.extract_strided_slice %26 {offsets = [0, 16], sizes = [8, 8], strides = [1, 1]} : vector<8x32xf32> to vector<8x8xf32>
    %cst_32 = arith.constant dense<0.000000e+00> : vector<8x8xf32>
    %70 = tpu.matmul %68, %69, %cst_32 {dimension_numbers = #tpu.dot_dimension_numbers<[1], [1], [0], [0], [0, 0, 1, 0], [], []>} : vector<8x8xf32>, vector<8x8xf32>, vector<8x8xf32> -> vector<8x8xf32>
    %cst_33 = arith.constant 0.353553385 : f32
    %71 = vector.broadcast %cst_33 : f32 to vector<8x8xf32>
    %72 = arith.mulf %70, %71 : vector<8x8xf32>
    %cst_34 = arith.constant -1.000000e+30 : f32
    %73 = vector.broadcast %cst_34 : f32 to vector<8x8xf32>
    %74 = arith.select %29, %72, %73 : vector<8x8xi1>, vector<8x8xf32>
    %cst_35 = arith.constant dense<0xFF800000> : vector<8xf32>
    %75 = vector.multi_reduction <maximumf>, %74, %cst_35 [1] : vector<8x8xf32> to vector<8xf32>
    %76 = vector.shape_cast %75 : vector<8xf32> to vector<8x1xf32>
    %77 = vector.broadcast %76 : vector<8x1xf32> to vector<8x8xf32>
    %78 = arith.subf %74, %77 : vector<8x8xf32>
    %79 = math.exp %78 : vector<8x8xf32>
    %cst_36 = arith.constant dense<0.000000e+00> : vector<8xf32>
    %80 = vector.multi_reduction <add>, %79, %cst_36 [1] : vector<8x8xf32> to vector<8xf32>
    %81 = vector.shape_cast %80 : vector<8xf32> to vector<8x1xf32>
    %82 = vector.broadcast %81 : vector<8x1xf32> to vector<8x8xf32>
    %83 = arith.divf %79, %82 : vector<8x8xf32>
    %c2 = arith.constant 2 : index
    %c0_37 = arith.constant 0 : index
    %c0_38 = arith.constant 0 : index
    %84 = vector.load %arg8[%c2, %c0_37, %c0_38] : memref<4x8x8xf32, #tpu.memory_space<vmem>>, vector<1x8x8xf32>
    %85 = vector.shape_cast %84 : vector<1x8x8xf32> to vector<8x8xf32>
    %86 = arith.mulf %83, %85 : vector<8x8xf32>
    %87 = vector.extract_strided_slice %22 {offsets = [0, 24], sizes = [8, 8], strides = [1, 1]} : vector<8x32xf32> to vector<8x8xf32>
    %88 = vector.extract_strided_slice %26 {offsets = [0, 24], sizes = [8, 8], strides = [1, 1]} : vector<8x32xf32> to vector<8x8xf32>
    %cst_39 = arith.constant dense<0.000000e+00> : vector<8x8xf32>
    %89 = tpu.matmul %87, %88, %cst_39 {dimension_numbers = #tpu.dot_dimension_numbers<[1], [1], [0], [0], [0, 0, 1, 0], [], []>} : vector<8x8xf32>, vector<8x8xf32>, vector<8x8xf32> -> vector<8x8xf32>
    %cst_40 = arith.constant 0.353553385 : f32
    %90 = vector.broadcast %cst_40 : f32 to vector<8x8xf32>
    %91 = arith.mulf %89, %90 : vector<8x8xf32>
    %cst_41 = arith.constant -1.000000e+30 : f32
    %92 = vector.broadcast %cst_41 : f32 to vector<8x8xf32>
    %93 = arith.select %29, %91, %92 : vector<8x8xi1>, vector<8x8xf32>
    %cst_42 = arith.constant dense<0xFF800000> : vector<8xf32>
    %94 = vector.multi_reduction <maximumf>, %93, %cst_42 [1] : vector<8x8xf32> to vector<8xf32>
    %95 = vector.shape_cast %94 : vector<8xf32> to vector<8x1xf32>
    %96 = vector.broadcast %95 : vector<8x1xf32> to vector<8x8xf32>
    %97 = arith.subf %93, %96 : vector<8x8xf32>
    %98 = math.exp %97 : vector<8x8xf32>
    %cst_43 = arith.constant dense<0.000000e+00> : vector<8xf32>
    %99 = vector.multi_reduction <add>, %98, %cst_43 [1] : vector<8x8xf32> to vector<8xf32>
    %100 = vector.shape_cast %99 : vector<8xf32> to vector<8x1xf32>
    %101 = vector.broadcast %100 : vector<8x1xf32> to vector<8x8xf32>
    %102 = arith.divf %98, %101 : vector<8x8xf32>
    %c3 = arith.constant 3 : index
    %c0_44 = arith.constant 0 : index
    %c0_45 = arith.constant 0 : index
    %103 = vector.load %arg8[%c3, %c0_44, %c0_45] : memref<4x8x8xf32, #tpu.memory_space<vmem>>, vector<1x8x8xf32>
    %104 = vector.shape_cast %103 : vector<1x8x8xf32> to vector<8x8xf32>
    %105 = arith.mulf %102, %104 : vector<8x8xf32>
    %c0_46 = arith.constant 0 : index
    %c0_47 = arith.constant 0 : index
    %106 = vector.load %arg9[%c0_46, %c0_47] : memref<4x4xf32, #tpu.memory_space<vmem>>, vector<4x4xf32>
    %107 = vector.extract_strided_slice %106 {offsets = [0, 0], sizes = [1, 1], strides = [1, 1]} : vector<4x4xf32> to vector<1x1xf32>
    %108 = vector.broadcast %107 : vector<1x1xf32> to vector<8x8xf32>
    %109 = arith.mulf %48, %108 : vector<8x8xf32>
    %110 = vector.extract_strided_slice %106 {offsets = [0, 1], sizes = [1, 1], strides = [1, 1]} : vector<4x4xf32> to vector<1x1xf32>
    %111 = vector.broadcast %110 : vector<1x1xf32> to vector<8x8xf32>
    %112 = arith.mulf %67, %111 : vector<8x8xf32>
    %113 = arith.addf %109, %112 : vector<8x8xf32>
    %114 = vector.extract_strided_slice %106 {offsets = [0, 2], sizes = [1, 1], strides = [1, 1]} : vector<4x4xf32> to vector<1x1xf32>
    %115 = vector.broadcast %114 : vector<1x1xf32> to vector<8x8xf32>
    %116 = arith.mulf %86, %115 : vector<8x8xf32>
    %117 = arith.addf %113, %116 : vector<8x8xf32>
    %118 = vector.extract_strided_slice %106 {offsets = [0, 3], sizes = [1, 1], strides = [1, 1]} : vector<4x4xf32> to vector<1x1xf32>
    %119 = vector.broadcast %118 : vector<1x1xf32> to vector<8x8xf32>
    %120 = arith.mulf %105, %119 : vector<8x8xf32>
    %121 = arith.addf %117, %120 : vector<8x8xf32>
    %122 = vector.extract_strided_slice %15 {offsets = [0, 0], sizes = [8, 8], strides = [1, 1]} : vector<8x32xf32> to vector<8x8xf32>
    %cst_48 = arith.constant dense<0.000000e+00> : vector<8x8xf32>
    %123 = tpu.matmul %121, %122, %cst_48 {dimension_numbers = #tpu.dot_dimension_numbers<[1], [0], [0], [1], [0, 0, 1, 1], [], []>} : vector<8x8xf32>, vector<8x8xf32>, vector<8x8xf32> -> vector<8x8xf32>
    %124 = vector.extract_strided_slice %106 {offsets = [1, 0], sizes = [1, 1], strides = [1, 1]} : vector<4x4xf32> to vector<1x1xf32>
    %125 = vector.broadcast %124 : vector<1x1xf32> to vector<8x8xf32>
    %126 = arith.mulf %48, %125 : vector<8x8xf32>
    %127 = vector.extract_strided_slice %106 {offsets = [1, 1], sizes = [1, 1], strides = [1, 1]} : vector<4x4xf32> to vector<1x1xf32>
    %128 = vector.broadcast %127 : vector<1x1xf32> to vector<8x8xf32>
    %129 = arith.mulf %67, %128 : vector<8x8xf32>
    %130 = arith.addf %126, %129 : vector<8x8xf32>
    %131 = vector.extract_strided_slice %106 {offsets = [1, 2], sizes = [1, 1], strides = [1, 1]} : vector<4x4xf32> to vector<1x1xf32>
    %132 = vector.broadcast %131 : vector<1x1xf32> to vector<8x8xf32>
    %133 = arith.mulf %86, %132 : vector<8x8xf32>
    %134 = arith.addf %130, %133 : vector<8x8xf32>
    %135 = vector.extract_strided_slice %106 {offsets = [1, 3], sizes = [1, 1], strides = [1, 1]} : vector<4x4xf32> to vector<1x1xf32>
    %136 = vector.broadcast %135 : vector<1x1xf32> to vector<8x8xf32>
    %137 = arith.mulf %105, %136 : vector<8x8xf32>
    %138 = arith.addf %134, %137 : vector<8x8xf32>
    %139 = vector.extract_strided_slice %15 {offsets = [0, 8], sizes = [8, 8], strides = [1, 1]} : vector<8x32xf32> to vector<8x8xf32>
    %cst_49 = arith.constant dense<0.000000e+00> : vector<8x8xf32>
    %140 = tpu.matmul %138, %139, %cst_49 {dimension_numbers = #tpu.dot_dimension_numbers<[1], [0], [0], [1], [0, 0, 1, 1], [], []>} : vector<8x8xf32>, vector<8x8xf32>, vector<8x8xf32> -> vector<8x8xf32>
    %141 = vector.extract_strided_slice %106 {offsets = [2, 0], sizes = [1, 1], strides = [1, 1]} : vector<4x4xf32> to vector<1x1xf32>
    %142 = vector.broadcast %141 : vector<1x1xf32> to vector<8x8xf32>
    %143 = arith.mulf %48, %142 : vector<8x8xf32>
    %144 = vector.extract_strided_slice %106 {offsets = [2, 1], sizes = [1, 1], strides = [1, 1]} : vector<4x4xf32> to vector<1x1xf32>
    %145 = vector.broadcast %144 : vector<1x1xf32> to vector<8x8xf32>
    %146 = arith.mulf %67, %145 : vector<8x8xf32>
    %147 = arith.addf %143, %146 : vector<8x8xf32>
    %148 = vector.extract_strided_slice %106 {offsets = [2, 2], sizes = [1, 1], strides = [1, 1]} : vector<4x4xf32> to vector<1x1xf32>
    %149 = vector.broadcast %148 : vector<1x1xf32> to vector<8x8xf32>
    %150 = arith.mulf %86, %149 : vector<8x8xf32>
    %151 = arith.addf %147, %150 : vector<8x8xf32>
    %152 = vector.extract_strided_slice %106 {offsets = [2, 3], sizes = [1, 1], strides = [1, 1]} : vector<4x4xf32> to vector<1x1xf32>
    %153 = vector.broadcast %152 : vector<1x1xf32> to vector<8x8xf32>
    %154 = arith.mulf %105, %153 : vector<8x8xf32>
    %155 = arith.addf %151, %154 : vector<8x8xf32>
    %156 = vector.extract_strided_slice %15 {offsets = [0, 16], sizes = [8, 8], strides = [1, 1]} : vector<8x32xf32> to vector<8x8xf32>
    %cst_50 = arith.constant dense<0.000000e+00> : vector<8x8xf32>
    %157 = tpu.matmul %155, %156, %cst_50 {dimension_numbers = #tpu.dot_dimension_numbers<[1], [0], [0], [1], [0, 0, 1, 1], [], []>} : vector<8x8xf32>, vector<8x8xf32>, vector<8x8xf32> -> vector<8x8xf32>
    %158 = vector.extract_strided_slice %106 {offsets = [3, 0], sizes = [1, 1], strides = [1, 1]} : vector<4x4xf32> to vector<1x1xf32>
    %159 = vector.broadcast %158 : vector<1x1xf32> to vector<8x8xf32>
    %160 = arith.mulf %48, %159 : vector<8x8xf32>
    %161 = vector.extract_strided_slice %106 {offsets = [3, 1], sizes = [1, 1], strides = [1, 1]} : vector<4x4xf32> to vector<1x1xf32>
    %162 = vector.broadcast %161 : vector<1x1xf32> to vector<8x8xf32>
    %163 = arith.mulf %67, %162 : vector<8x8xf32>
    %164 = arith.addf %160, %163 : vector<8x8xf32>
    %165 = vector.extract_strided_slice %106 {offsets = [3, 2], sizes = [1, 1], strides = [1, 1]} : vector<4x4xf32> to vector<1x1xf32>
    %166 = vector.broadcast %165 : vector<1x1xf32> to vector<8x8xf32>
    %167 = arith.mulf %86, %166 : vector<8x8xf32>
    %168 = arith.addf %164, %167 : vector<8x8xf32>
    %169 = vector.extract_strided_slice %106 {offsets = [3, 3], sizes = [1, 1], strides = [1, 1]} : vector<4x4xf32> to vector<1x1xf32>
    %170 = vector.broadcast %169 : vector<1x1xf32> to vector<8x8xf32>
    %171 = arith.mulf %105, %170 : vector<8x8xf32>
    %172 = arith.addf %168, %171 : vector<8x8xf32>
    %173 = vector.extract_strided_slice %15 {offsets = [0, 24], sizes = [8, 8], strides = [1, 1]} : vector<8x32xf32> to vector<8x8xf32>
    %cst_51 = arith.constant dense<0.000000e+00> : vector<8x8xf32>
    %174 = tpu.matmul %172, %173, %cst_51 {dimension_numbers = #tpu.dot_dimension_numbers<[1], [0], [0], [1], [0, 0, 1, 1], [], []>} : vector<8x8xf32>, vector<8x8xf32>, vector<8x8xf32> -> vector<8x8xf32>
    %175 = tpu.concatenate %123, %140, %157, %174 in 1 : vector<8x8xf32>, vector<8x8xf32>, vector<8x8xf32>, vector<8x8xf32> -> vector<8x32xf32>
    %c0_52 = arith.constant 0 : index
    %c0_53 = arith.constant 0 : index
    %176 = vector.load %arg10[%c0_52, %c0_53] : memref<32x32xf32, #tpu.memory_space<vmem>>, vector<32x32xf32>
    %cst_54 = arith.constant dense<0.000000e+00> : vector<8x32xf32>
    %177 = tpu.matmul %175, %176, %cst_54 {dimension_numbers = #tpu.dot_dimension_numbers<[1], [0], [0], [1], [0, 0, 1, 1], [], []>} : vector<8x32xf32>, vector<32x32xf32>, vector<8x32xf32> -> vector<8x32xf32>
    %c0_55 = arith.constant 0 : index
    %c0_56 = arith.constant 0 : index
    %178 = vector.load %arg11[%c0_55, %c0_56] : memref<1x32xf32, #tpu.memory_space<vmem>>, vector<1x32xf32>
    %179 = vector.broadcast %178 : vector<1x32xf32> to vector<8x32xf32>
    %180 = arith.addf %177, %179 : vector<8x32xf32>
    %c0_57 = arith.constant 0 : index
    %c0_58 = arith.constant 0 : index
    %181 = vector.load %arg12[%c0_57, %c0_58] : memref<8x1xf32, #tpu.memory_space<vmem>>, vector<8x1xf32>
    %182 = vector.broadcast %181 : vector<8x1xf32> to vector<8x32xf32>
    %183 = arith.mulf %180, %182 : vector<8x32xf32>
    %c0_59 = arith.constant 0 : index
    %c0_60 = arith.constant 0 : index
    %c0_61 = arith.constant 0 : index
    %184 = vector.load %arg13[%c0_59, %c0_60, %c0_61] : memref<1x8x32xf32, #tpu.memory_space<vmem>>, vector<1x8x32xf32>
    %185 = vector.shape_cast %184 : vector<1x8x32xf32> to vector<8x32xf32>
    %186 = vector.shape_cast %183 : vector<8x32xf32> to vector<1x8x32xf32>
    tpu.vector_store %arg13[%c0_59, %c0_60, %c0_61], %186 {strides = array<i32>} : memref<1x8x32xf32, #tpu.memory_space<vmem>>, vector<1x8x32xf32>,
    return
  }
  func.func @transform_0(%arg0: i32) -> (i32, i32, i32) {
    %c0_i32 = arith.constant 0 : i32
    %c0_i32_0 = arith.constant 0 : i32
    %c0_i32_1 = arith.constant 0 : i32
    return %arg0, %c0_i32, %c0_i32_0 : i32, i32, i32
  }
  func.func @transform_1(%arg0: i32) -> (i32, i32) {
    %c0_i32 = arith.constant 0 : i32
    %c0_i32_0 = arith.constant 0 : i32
    %c0_i32_1 = arith.constant 0 : i32
    return %c0_i32, %c0_i32_0 : i32, i32
  }
  func.func @transform_2(%arg0: i32) -> (i32, i32) {
    %c0_i32 = arith.constant 0 : i32
    %c0_i32_0 = arith.constant 0 : i32
    %c0_i32_1 = arith.constant 0 : i32
    return %c0_i32, %c0_i32_0 : i32, i32
  }
  func.func @transform_3(%arg0: i32) -> (i32, i32) {
    %c0_i32 = arith.constant 0 : i32
    %c0_i32_0 = arith.constant 0 : i32
    %c0_i32_1 = arith.constant 0 : i32
    return %c0_i32, %c0_i32_0 : i32, i32
  }
  func.func @transform_4(%arg0: i32) -> (i32, i32) {
    %c0_i32 = arith.constant 0 : i32
    %c0_i32_0 = arith.constant 0 : i32
    %c0_i32_1 = arith.constant 0 : i32
    return %c0_i32, %c0_i32_0 : i32, i32
  }
  func.func @transform_5(%arg0: i32) -> (i32, i32) {
    %c0_i32 = arith.constant 0 : i32
    %c0_i32_0 = arith.constant 0 : i32
    %c0_i32_1 = arith.constant 0 : i32
    return %c0_i32, %c0_i32_0 : i32, i32
  }
  func.func @transform_6(%arg0: i32) -> (i32, i32) {
    %c0_i32 = arith.constant 0 : i32
    %c0_i32_0 = arith.constant 0 : i32
    %c0_i32_1 = arith.constant 0 : i32
    return %c0_i32, %c0_i32_0 : i32, i32
  }
  func.func @transform_7(%arg0: i32) -> (i32, i32, i32) {
    %c0_i32 = arith.constant 0 : i32
    %c0_i32_0 = arith.constant 0 : i32
    %c0_i32_1 = arith.constant 0 : i32
    %c0_i32_2 = arith.constant 0 : i32
    return %c0_i32, %c0_i32_0, %c0_i32_1 : i32, i32, i32
  }
  func.func @transform_8(%arg0: i32) -> (i32, i32) {
    %c0_i32 = arith.constant 0 : i32
    %c0_i32_0 = arith.constant 0 : i32
    %c0_i32_1 = arith.constant 0 : i32
    return %c0_i32, %c0_i32_0 : i32, i32
  }
  func.func @transform_9(%arg0: i32) -> (i32, i32) {
    %c0_i32 = arith.constant 0 : i32
    %c0_i32_0 = arith.constant 0 : i32
    %c0_i32_1 = arith.constant 0 : i32
    return %c0_i32, %c0_i32_0 : i32, i32
  }
  func.func @transform_10(%arg0: i32) -> (i32, i32) {
    %c0_i32 = arith.constant 0 : i32
    %c0_i32_0 = arith.constant 0 : i32
    %c0_i32_1 = arith.constant 0 : i32
    return %c0_i32, %c0_i32_0 : i32, i32
  }
  func.func @transform_11(%arg0: i32) -> (i32, i32) {
    %c0_i32 = arith.constant 0 : i32
    %c0_i32_0 = arith.constant 0 : i32
    %c0_i32_1 = arith.constant 0 : i32
    return %c0_i32, %c0_i32_0 : i32, i32
  }
  func.func @transform_12(%arg0: i32) -> (i32, i32, i32) {
    %c0_i32 = arith.constant 0 : i32
    %c0_i32_0 = arith.constant 0 : i32
    %c0_i32_1 = arith.constant 0 : i32
    return %arg0, %c0_i32, %c0_i32_0 : i32, i32, i32
  }
}

</mosaic_0001>

<llo_original>
// kernel: tpu_custom_call.1
$region0: #{tpu_custom_call.1}
  #allocation0 [shape = 'u32[]', space=smem, size = 0x4, offset = 0x4, fixed_abs, tag = 'smem constant byte address 0x4 - core index']
  #allocation1 [shape = 'u32[72,128]{1,0:T(1,128)}', space=vmem, size = 0x9000, scoped, tag = 'internal scratch']
  %s0 = inlined_call_operand.hbm [shape: f32[2,8,32], index: 0, kind: input, shape index: {}]
  %s1 = inlined_call_operand.vmem [shape: f32[8,8], index: 1, kind: input, shape index: {}]
  %s2 = inlined_call_operand.hbm [shape: f32[32,96], index: 2, kind: input, shape index: {}]
  %s3 = inlined_call_operand.vmem [shape: f32[1,96], index: 3, kind: input, shape index: {}]
  %s4 = inlined_call_operand.hbm [shape: f32[32,32], index: 4, kind: input, shape index: {}]
  %s5 = inlined_call_operand.hbm [shape: f32[8,32], index: 5, kind: input, shape index: {}]
  %s6 = inlined_call_operand.hbm [shape: f32[8,32], index: 6, kind: input, shape index: {}]
  %s7 = inlined_call_operand.hbm [shape: f32[4,8,8], index: 7, kind: input, shape index: {}]
  %s8 = inlined_call_operand.vmem [shape: f32[4,4], index: 8, kind: input, shape index: {}]
  %s9 = inlined_call_operand.hbm [shape: f32[32,32], index: 9, kind: input, shape index: {}]
  %s10 = inlined_call_operand.vmem [shape: f32[1,32], index: 10, kind: input, shape index: {}]
  %s11 = inlined_call_operand.vmem [shape: f32[8,1], index: 11, kind: input, shape index: {}]
  %s12 = inlined_call_operand.hbm [shape: f32[2,8,32], index: 12, kind: output, shape index: {}]
  %s13 = sld [smem:[#allocation0]]
  $region109: #{tpu_custom_call.1} parent=0
    _
  %s15 = ssub.s32 1, %s13
  %s16 = scalar_select 0, %s15, %s13
  $region1: #{tpu_custom_call.1} parent=0
    #allocation2 [shape = 'u8[8192]{0}', space=vmem, size = 0x2000, scoped, tag = 'input window, operand 0']
    #allocation3 [shape = 's32[2]{0}', space=sflag, size = 0x8, scoped, tag = 'scoped memory for tpu_custom_call.1']
    #allocation4 [shape = 's32[2]{0}', space=sflag, size = 0x8, scoped, tag = 'scoped memory for tpu_custom_call.1']
    #allocation5 [shape = 'u8[16384]{0}', space=vmem, size = 0x4000, scoped, tag = 'input window, operand 2, single buffered']
    #allocation6 [shape = 's32[1]{0}', space=sflag, size = 0x4, scoped, tag = 'scoped memory for tpu_custom_call.1']
    #allocation7 [shape = 'u8[16384]{0}', space=vmem, size = 0x4000, scoped, tag = 'input window, operand 4, single buffered']
    #allocation8 [shape = 'u8[4096]{0}', space=vmem, size = 0x1000, scoped, tag = 'input window, operand 5, single buffered']
    #allocation9 [shape = 's32[1]{0}', space=sflag, size = 0x4, scoped, tag = 'scoped memory for tpu_custom_call.1']
    #allocation10 [shape = 'u8[4096]{0}', space=vmem, size = 0x1000, scoped, tag = 'input window, operand 6, single buffered']
    #allocation11 [shape = 'u8[16384]{0}', space=vmem, size = 0x4000, scoped, tag = 'input window, operand 7, single buffered']
    #allocation12 [shape = 's32[1]{0}', space=sflag, size = 0x4, scoped, tag = 'scoped memory for tpu_custom_call.1']
    #allocation13 [shape = 'u8[16384]{0}', space=vmem, size = 0x4000, scoped, tag = 'input window, operand 9, single buffered']
    #allocation14 [shape = 'u8[8192]{0}', space=vmem, size = 0x2000, scoped, tag = 'output window, operand 0']
    %17 = vsyncpa [#allocation3], 0
    %s18 = scalar_lea.sflag [#allocation3], 1
    %19 = vsyncpa %s18, 0
    %20 = vsyncpa [#allocation6], 0
    %21 = vsyncpa [#allocation9], 0
    %22 = vsyncpa [#allocation12], 0
    %23 = vsyncpa [#allocation4], 0
    %s24 = scalar_lea.sflag [#allocation4], 1
    %25 = vsyncpa %s24, 0
    loop: start=0, step=1, limit=4
    $region2: #{tpu_custom_call.1} parent=1 // loop_pre_header
      _
    $region3: #{tpu_custom_call.1} parent=1 // loop_header
      %s27 = sphi 0, %s31
      %p28 = scmp.ge.s32.totalorder %s27, 4
      %s37 = sphi 0, %s39
      %s40 = sphi 0, %s37
      %s41 = sphi 0, %s40
      %s57 = sphi 0, %s41
      %s61 = sphi 0, %s61
      %s63 = sphi 0, %s61
      %s64 = sphi 0, %s63
      %s78 = sphi 0, %s64
      %s82 = sphi 0, %s82
      %s84 = sphi 0, %s82
      %s85 = sphi 0, %s84
      %s99 = sphi 0, %s85
      %s103 = sphi 0, %s103
      %s105 = sphi 0, %s103
      %s106 = sphi 0, %s105
      %s120 = sphi 0, %s106
      %s124 = sphi 0, %s124
      %s126 = sphi 0, %s124
      %s127 = sphi 0, %s126
      %s141 = sphi 0, %s127
      %s145 = sphi 0, %s145
      %s147 = sphi 0, %s145
      %s148 = sphi 0, %s147
      %s162 = sphi 0, %s148
      %s166 = sphi 0, %s166
      %s168 = sphi 0, %s166
      %s169 = sphi 0, %s168
      %s183 = sphi 0, %s169
      %s187 = sphi 0, %s187
      %s189 = sphi 0, %s187
      %s190 = sphi 0, %s189
      %s204 = sphi 0, %s190
      %s208 = sphi 0, %s208
      %s210 = sphi 0, %s208
      %s211 = sphi 0, %s210
      %s225 = sphi 0, %s211
      %s229 = sphi 0, %s229
      %s231 = sphi 0, %s229
      %s232 = sphi 0, %s231
      %s246 = sphi 0, %s232
      %s250 = sphi 0, %s250
      %s252 = sphi 0, %s250
      %s253 = sphi 0, %s252
      %s267 = sphi 0, %s253
      %s271 = sphi 0, %s271
      %s273 = sphi 0, %s271
      %s274 = sphi 0, %s273
      %s288 = sphi 0, %s274
      %s294 = sphi 0, %s296
      %s297 = sphi 0, %s294
      %s298 = sphi 0, %s297
      %s314 = sphi 0, %s298
    $region4: #{tpu_custom_call.1} parent=1 // loop_header_branch
      %30 = sbr.rel (%p28) target = $region8
    $region5: #{tpu_custom_call.1} parent=1 // loop_body
      %s32 = ssub.s32 %s27, 1
      %s33 = ssub.s32 %s27, 2
      %s34 = sadd.s32 %s27, 1
      %s35 = ssub.s32 %s27, %s34
      %p36 = scmp.eq.s32.totalorder %s35, 0
      %s38 = sadd.s32 %s37, 1
      %s39 = scalar_select %p36, %s37, %s38
      %p42 = pneg %p36
      %p43 = scmp.eq.s32.totalorder %s27, 1
      %p44 = por %p42, %p43
      %p45 = scmp.ne.s32.totalorder %s37, %s40
      %p46 = scmp.eq.s32.totalorder %s27, 0
      %p47 = por %p45, %p46
      %p48 = scmp.ne.s32.totalorder %s37, %s40
      %p49 = scmp.eq.s32.totalorder %s32, 1
      %p50 = por %p48, %p49
      %p51 = scmp.ne.s32.totalorder %s40, %s41
      %p52 = scmp.eq.s32.totalorder %s32, 0
      %p53 = por %p51, %p52
      %p54 = scmp.ne.s32.totalorder %s40, %s41
      %p55 = scmp.eq.s32.totalorder %s33, 1
      %p56 = por %p54, %p55
      %p58 = scmp.ne.s32.totalorder %s41, %s57
      %p59 = scmp.eq.s32.totalorder %s33, 0
      %p60 = por %p58, %p59
      %s62 = sadd.s32 %s61, 1
      %p65 = scmp.eq.s32.totalorder %s27, 1
      %p66 = scmp.ne.s32.totalorder %s61, %s63
      %p67 = scmp.eq.s32.totalorder %s27, 0
      %p68 = por %p66, %p67
      %p69 = scmp.ne.s32.totalorder %s61, %s63
      %p70 = scmp.eq.s32.totalorder %s32, 1
      %p71 = por %p69, %p70
      %p72 = scmp.ne.s32.totalorder %s63, %s64
      %p73 = scmp.eq.s32.totalorder %s32, 0
      %p74 = por %p72, %p73
      %p75 = scmp.ne.s32.totalorder %s63, %s64
      %p76 = scmp.eq.s32.totalorder %s33, 1
      %p77 = por %p75, %p76
      %p79 = scmp.ne.s32.totalorder %s64, %s78
      %p80 = scmp.eq.s32.totalorder %s33, 0
      %p81 = por %p79, %p80
      %s83 = sadd.s32 %s82, 1
      %p86 = scmp.eq.s32.totalorder %s27, 1
      %p87 = scmp.ne.s32.totalorder %s82, %s84
      %p88 = scmp.eq.s32.totalorder %s27, 0
      %p89 = por %p87, %p88
      %p90 = scmp.ne.s32.totalorder %s82, %s84
      %p91 = scmp.eq.s32.totalorder %s32, 1
      %p92 = por %p90, %p91
      %p93 = scmp.ne.s32.totalorder %s84, %s85
      %p94 = scmp.eq.s32.totalorder %s32, 0
      %p95 = por %p93, %p94
      %p96 = scmp.ne.s32.totalorder %s84, %s85
      %p97 = scmp.eq.s32.totalorder %s33, 1
      %p98 = por %p96, %p97
      %p100 = scmp.ne.s32.totalorder %s85, %s99
      %p101 = scmp.eq.s32.totalorder %s33, 0
      %p102 = por %p100, %p101
      %s104 = sadd.s32 %s103, 1
      %p107 = scmp.eq.s32.totalorder %s27, 1
      %p108 = scmp.ne.s32.totalorder %s103, %s105
      %p109 = scmp.eq.s32.totalorder %s27, 0
      %p110 = por %p108, %p109
      %p111 = scmp.ne.s32.totalorder %s103, %s105
      %p112 = scmp.eq.s32.totalorder %s32, 1
      %p113 = por %p111, %p112
      %p114 = scmp.ne.s32.totalorder %s105, %s106
      %p115 = scmp.eq.s32.totalorder %s32, 0
      %p116 = por %p114, %p115
      %p117 = scmp.ne.s32.totalorder %s105, %s106
      %p118 = scmp.eq.s32.totalorder %s33, 1
      %p119 = por %p117, %p118
      %p121 = scmp.ne.s32.totalorder %s106, %s120
      %p122 = scmp.eq.s32.totalorder %s33, 0
      %p123 = por %p121, %p122
      %s125 = sadd.s32 %s124, 1
      %p128 = scmp.eq.s32.totalorder %s27, 1
      %p129 = scmp.ne.s32.totalorder %s124, %s126
      %p130 = scmp.eq.s32.totalorder %s27, 0
      %p131 = por %p129, %p130
      %p132 = scmp.ne.s32.totalorder %s124, %s126
      %p133 = scmp.eq.s32.totalorder %s32, 1
      %p134 = por %p132, %p133
      %p135 = scmp.ne.s32.totalorder %s126, %s127
      %p136 = scmp.eq.s32.totalorder %s32, 0
      %p137 = por %p135, %p136
      %p138 = scmp.ne.s32.totalorder %s126, %s127
      %p139 = scmp.eq.s32.totalorder %s33, 1
      %p140 = por %p138, %p139
      %p142 = scmp.ne.s32.totalorder %s127, %s141
      %p143 = scmp.eq.s32.totalorder %s33, 0
      %p144 = por %p142, %p143
      %s146 = sadd.s32 %s145, 1
      %p149 = scmp.eq.s32.totalorder %s27, 1
      %p150 = scmp.ne.s32.totalorder %s145, %s147
      %p151 = scmp.eq.s32.totalorder %s27, 0
      %p152 = por %p150, %p151
      %p153 = scmp.ne.s32.totalorder %s145, %s147
      %p154 = scmp.eq.s32.totalorder %s32, 1
      %p155 = por %p153, %p154
      %p156 = scmp.ne.s32.totalorder %s147, %s148
      %p157 = scmp.eq.s32.totalorder %s32, 0
      %p158 = por %p156, %p157
      %p159 = scmp.ne.s32.totalorder %s147, %s148
      %p160 = scmp.eq.s32.totalorder %s33, 1
      %p161 = por %p159, %p160
      %p163 = scmp.ne.s32.totalorder %s148, %s162
      %p164 = scmp.eq.s32.totalorder %s33, 0
      %p165 = por %p163, %p164
      %s167 = sadd.s32 %s166, 1
      %p170 = scmp.eq.s32.totalorder %s27, 1
      %p171 = scmp.ne.s32.totalorder %s166, %s168
      %p172 = scmp.eq.s32.totalorder %s27, 0
      %p173 = por %p171, %p172
      %p174 = scmp.ne.s32.totalorder %s166, %s168
      %p175 = scmp.eq.s32.totalorder %s32, 1
      %p176 = por %p174, %p175
      %p177 = scmp.ne.s32.totalorder %s168, %s169
      %p178 = scmp.eq.s32.totalorder %s32, 0
      %p179 = por %p177, %p178
      %p180 = scmp.ne.s32.totalorder %s168, %s169
      %p181 = scmp.eq.s32.totalorder %s33, 1
      %p182 = por %p180, %p181
      %p184 = scmp.ne.s32.totalorder %s169, %s183
      %p185 = scmp.eq.s32.totalorder %s33, 0
      %p186 = por %p184, %p185
      %s188 = sadd.s32 %s187, 1
      %p191 = scmp.eq.s32.totalorder %s27, 1
      %p192 = scmp.ne.s32.totalorder %s187, %s189
      %p193 = scmp.eq.s32.totalorder %s27, 0
      %p194 = por %p192, %p193
      %p195 = scmp.ne.s32.totalorder %s187, %s189
      %p196 = scmp.eq.s32.totalorder %s32, 1
      %p197 = por %p195, %p196
      %p198 = scmp.ne.s32.totalorder %s189, %s190
      %p199 = scmp.eq.s32.totalorder %s32, 0
      %p200 = por %p198, %p199
      %p201 = scmp.ne.s32.totalorder %s189, %s190
      %p202 = scmp.eq.s32.totalorder %s33, 1
      %p203 = por %p201, %p202
      %p205 = scmp.ne.s32.totalorder %s190, %s204
      %p206 = scmp.eq.s32.totalorder %s33, 0
      %p207 = por %p205, %p206
      %s209 = sadd.s32 %s208, 1
      %p212 = scmp.eq.s32.totalorder %s27, 1
      %p213 = scmp.ne.s32.totalorder %s208, %s210
      %p214 = scmp.eq.s32.totalorder %s27, 0
      %p215 = por %p213, %p214
      %p216 = scmp.ne.s32.totalorder %s208, %s210
      %p217 = scmp.eq.s32.totalorder %s32, 1
      %p218 = por %p216, %p217
      %p219 = scmp.ne.s32.totalorder %s210, %s211
      %p220 = scmp.eq.s32.totalorder %s32, 0
      %p221 = por %p219, %p220
      %p222 = scmp.ne.s32.totalorder %s210, %s211
      %p223 = scmp.eq.s32.totalorder %s33, 1
      %p224 = por %p222, %p223
      %p226 = scmp.ne.s32.totalorder %s211, %s225
      %p227 = scmp.eq.s32.totalorder %s33, 0
      %p228 = por %p226, %p227
      %s230 = sadd.s32 %s229, 1
      %p233 = scmp.eq.s32.totalorder %s27, 1
      %p234 = scmp.ne.s32.totalorder %s229, %s231
      %p235 = scmp.eq.s32.totalorder %s27, 0
      %p236 = por %p234, %p235
      %p237 = scmp.ne.s32.totalorder %s229, %s231
      %p238 = scmp.eq.s32.totalorder %s32, 1
      %p239 = por %p237, %p238
      %p240 = scmp.ne.s32.totalorder %s231, %s232
      %p241 = scmp.eq.s32.totalorder %s32, 0
      %p242 = por %p240, %p241
      %p243 = scmp.ne.s32.totalorder %s231, %s232
      %p244 = scmp.eq.s32.totalorder %s33, 1
      %p245 = por %p243, %p244
      %p247 = scmp.ne.s32.totalorder %s232, %s246
      %p248 = scmp.eq.s32.totalorder %s33, 0
      %p249 = por %p247, %p248
      %s251 = sadd.s32 %s250, 1
      %p254 = scmp.eq.s32.totalorder %s27, 1
      %p255 = scmp.ne.s32.totalorder %s250, %s252
      %p256 = scmp.eq.s32.totalorder %s27, 0
      %p257 = por %p255, %p256
      %p258 = scmp.ne.s32.totalorder %s250, %s252
      %p259 = scmp.eq.s32.totalorder %s32, 1
      %p260 = por %p258, %p259
      %p261 = scmp.ne.s32.totalorder %s252, %s253
      %p262 = scmp.eq.s32.totalorder %s32, 0
      %p263 = por %p261, %p262
      %p264 = scmp.ne.s32.totalorder %s252, %s253
      %p265 = scmp.eq.s32.totalorder %s33, 1
      %p266 = por %p264, %p265
      %p268 = scmp.ne.s32.totalorder %s253, %s267
      %p269 = scmp.eq.s32.totalorder %s33, 0
      %p270 = por %p268, %p269
      %s272 = sadd.s32 %s271, 1
      %p275 = scmp.eq.s32.totalorder %s27, 1
      %p276 = scmp.ne.s32.totalorder %s271, %s273
      %p277 = scmp.eq.s32.totalorder %s27, 0
      %p278 = por %p276, %p277
      %p279 = scmp.ne.s32.totalorder %s271, %s273
      %p280 = scmp.eq.s32.totalorder %s32, 1
      %p281 = por %p279, %p280
      %p282 = scmp.ne.s32.totalorder %s273, %s274
      %p283 = scmp.eq.s32.totalorder %s32, 0
      %p284 = por %p282, %p283
      %p285 = scmp.ne.s32.totalorder %s273, %s274
      %p286 = scmp.eq.s32.totalorder %s33, 1
      %p287 = por %p285, %p286
      %p289 = scmp.ne.s32.totalorder %s274, %s288
      %p290 = scmp.eq.s32.totalorder %s33, 0
      %p291 = por %p289, %p290
      %s292 = ssub.s32 %s27, %s34
      %p293 = scmp.eq.s32.totalorder %s292, 0
      %s295 = sadd.s32 %s294, 1
      %s296 = scalar_select %p293, %s294, %s295
      %p299 = pneg %p293
      %p300 = scmp.eq.s32.totalorder %s27, 1
      %p301 = por %p299, %p300
      %p302 = scmp.ne.s32.totalorder %s294, %s297
      %p303 = scmp.eq.s32.totalorder %s27, 0
      %p304 = por %p302, %p303
      %p305 = scmp.ne.s32.totalorder %s294, %s297
      %p306 = scmp.eq.s32.totalorder %s32, 1
      %p307 = por %p305, %p306
      %p308 = scmp.ne.s32.totalorder %s297, %s298
      %p309 = scmp.eq.s32.totalorder %s32, 0
      %p310 = por %p308, %p309
      %p311 = scmp.ne.s32.totalorder %s297, %s298
      %p312 = scmp.eq.s32.totalorder %s33, 1
      %p313 = por %p311, %p312
      %p315 = scmp.ne.s32.totalorder %s298, %s314
      %p316 = scmp.eq.s32.totalorder %s33, 0
      %p317 = por %p315, %p316
      %p318 = scmp.le.s32.totalorder 1, %s27
      %p319 = scmp.lt.s32.totalorder %s27, 3
      %p320 = pnand %p318, %p319
      %p321 = pneg %p320
      // Predicated region
      $region9: #{tpu_custom_call.1} parent=5 // pred_check
        _
      $region10: #{tpu_custom_call.1} parent=5 // pred_check_branch
        %323 = sbr.rel (%p320) target = $region12
      $region11: #{tpu_custom_call.1} parent=5 // pred_region
        %s324 = ssub.s32 %s27, 1
        // Predicated region
        $region13: #{tpu_custom_call.1} parent=11 // pred_check
          %p325 = pneg %p74
        $region14: #{tpu_custom_call.1} parent=11 // pred_check_branch
          %327 = sbr.rel (%p325) target = $region16
        $region15: #{tpu_custom_call.1} parent=11 // pred_region
          _
        $region16: #{tpu_custom_call.1} parent=11 // pred_fallthru
          _
        // Predicated region
        $region17: #{tpu_custom_call.1} parent=11 // pred_check
          %p328 = pneg %p95
        $region18: #{tpu_custom_call.1} parent=11 // pred_check_branch
          %330 = sbr.rel (%p328) target = $region20
        $region19: #{tpu_custom_call.1} parent=11 // pred_region
          %332 = vsyncadd [#allocation6], 0
          %s333 = sshll.u32 %s2, 4
          %s334 = int_to_ptr.hbm [resolvable:$true] %s333
          %s335 = sshll.u32 [#allocation5], 4
          %s336 = int_to_ptr.vmem [resolvable:$true] %s335
          %341 = dma.hbm_to_vmem [thread:$0]  %s334, 512, %s336, [#allocation6], 128, 128, 8
        $region20: #{tpu_custom_call.1} parent=11 // pred_fallthru
          _
        // Predicated region
        $region21: #{tpu_custom_call.1} parent=11 // pred_check
          %p342 = pneg %p116
        $region22: #{tpu_custom_call.1} parent=11 // pred_check_branch
          %344 = sbr.rel (%p342) target = $region24
        $region23: #{tpu_custom_call.1} parent=11 // pred_region
          _
        $region24: #{tpu_custom_call.1} parent=11 // pred_fallthru
          _
        // Predicated region
        $region25: #{tpu_custom_call.1} parent=11 // pred_check
          %p345 = pneg %p137
        $region26: #{tpu_custom_call.1} parent=11 // pred_check_branch
          %347 = sbr.rel (%p345) target = $region28
        $region27: #{tpu_custom_call.1} parent=11 // pred_region
          %349 = vsyncadd [#allocation6], 0
          %s350 = sshll.u32 %s4, 4
          %s351 = int_to_ptr.hbm [resolvable:$true] %s350
          %s352 = sshll.u32 [#allocation7], 4
          %s353 = int_to_ptr.vmem [resolvable:$true] %s352
          %358 = dma.hbm_to_vmem [thread:$0]  %s351, 512, %s353, [#allocation6], 128, 128, 8
        $region28: #{tpu_custom_call.1} parent=11 // pred_fallthru
          _
        // Predicated region
        $region29: #{tpu_custom_call.1} parent=11 // pred_check
          %p359 = pneg %p158
        $region30: #{tpu_custom_call.1} parent=11 // pred_check_branch
          %361 = sbr.rel (%p359) target = $region32
        $region31: #{tpu_custom_call.1} parent=11 // pred_region
          %363 = vsyncadd [#allocation9], 0
          %s365 = sshll.u32 %s5, 4
          %s366 = int_to_ptr.hbm [resolvable:$true] %s365
          %s367 = sshll.u32 [#allocation8], 4
          %s368 = int_to_ptr.vmem [resolvable:$true] %s367
          %370 = dma.hbm_to_vmem [thread:$0]  %s366, 128, %s368, [#allocation9]
        $region32: #{tpu_custom_call.1} parent=11 // pred_fallthru
          _
        // Predicated region
        $region33: #{tpu_custom_call.1} parent=11 // pred_check
          %p371 = pneg %p179
        $region34: #{tpu_custom_call.1} parent=11 // pred_check_branch
          %373 = sbr.rel (%p371) target = $region36
        $region35: #{tpu_custom_call.1} parent=11 // pred_region
          %375 = vsyncadd [#allocation9], 0
          %s377 = sshll.u32 %s6, 4
          %s378 = int_to_ptr.hbm [resolvable:$true] %s377
          %s379 = sshll.u32 [#allocation10], 4
          %s380 = int_to_ptr.vmem [resolvable:$true] %s379
          %382 = dma.hbm_to_vmem [thread:$0]  %s378, 128, %s380, [#allocation9]
        $region36: #{tpu_custom_call.1} parent=11 // pred_fallthru
          _
        // Predicated region
        $region37: #{tpu_custom_call.1} parent=11 // pred_check
          %p383 = pneg %p200
        $region38: #{tpu_custom_call.1} parent=11 // pred_check_branch
          %385 = sbr.rel (%p383) target = $region40
        $region39: #{tpu_custom_call.1} parent=11 // pred_region
          %387 = vsyncadd [#allocation12], 0
          %s388 = sshll.u32 %s7, 4
          %s389 = int_to_ptr.hbm [resolvable:$true] %s388
          %s390 = sshll.u32 [#allocation11], 4
          %s391 = int_to_ptr.vmem [resolvable:$true] %s390
          %396 = dma.hbm_to_vmem [thread:$0]  %s389, 512, %s391, [#allocation12], 128, 128, 8
        $region40: #{tpu_custom_call.1} parent=11 // pred_fallthru
          _
        // Predicated region
        $region41: #{tpu_custom_call.1} parent=11 // pred_check
          %p397 = pneg %p221
        $region42: #{tpu_custom_call.1} parent=11 // pred_check_branch
          %399 = sbr.rel (%p397) target = $region44
        $region43: #{tpu_custom_call.1} parent=11 // pred_region
          _
        $region44: #{tpu_custom_call.1} parent=11 // pred_fallthru
          _
        // Predicated region
        $region45: #{tpu_custom_call.1} parent=11 // pred_check
          %p400 = pneg %p242
        $region46: #{tpu_custom_call.1} parent=11 // pred_check_branch
          %402 = sbr.rel (%p400) target = $region48
        $region47: #{tpu_custom_call.1} parent=11 // pred_region
          %404 = vsyncadd [#allocation12], 0
          %s405 = sshll.u32 %s9, 4
          %s406 = int_to_ptr.hbm [resolvable:$true] %s405
          %s407 = sshll.u32 [#allocation13], 4
          %s408 = int_to_ptr.vmem [resolvable:$true] %s407
          %413 = dma.hbm_to_vmem [thread:$0]  %s406, 512, %s408, [#allocation12], 128, 128, 8
        $region48: #{tpu_custom_call.1} parent=11 // pred_fallthru
          _
        // Predicated region
        $region49: #{tpu_custom_call.1} parent=11 // pred_check
          %p414 = pneg %p263
        $region50: #{tpu_custom_call.1} parent=11 // pred_check_branch
          %416 = sbr.rel (%p414) target = $region52
        $region51: #{tpu_custom_call.1} parent=11 // pred_region
          _
        $region52: #{tpu_custom_call.1} parent=11 // pred_fallthru
          _
        // Predicated region
        $region53: #{tpu_custom_call.1} parent=11 // pred_check
          %p417 = pneg %p284
        $region54: #{tpu_custom_call.1} parent=11 // pred_check_branch
          %419 = sbr.rel (%p417) target = $region56
        $region55: #{tpu_custom_call.1} parent=11 // pred_region
          _
        $region56: #{tpu_custom_call.1} parent=11 // pred_fallthru
          _
      $region12: #{tpu_custom_call.1} parent=5 // pred_fallthru
        _
      %p420 = scmp.lt.s32.totalorder %s27, 2
      // Predicated region
      $region57: #{tpu_custom_call.1} parent=5 // pred_check
        %p421 = pneg %p420
      $region58: #{tpu_custom_call.1} parent=5 // pred_check_branch
        %423 = sbr.rel (%p421) target = $region60
      $region59: #{tpu_custom_call.1} parent=5 // pred_region
        // Predicated region
        $region61: #{tpu_custom_call.1} parent=59 // pred_check
          %p424 = pneg %p47
        $region62: #{tpu_custom_call.1} parent=59 // pred_check_branch
          %426 = sbr.rel (%p424) target = $region64
        $region63: #{tpu_custom_call.1} parent=59 // pred_region
          %s427 = sand.u32 %s37, 1
          %s428 = scalar_lea.sflag [#allocation3], %s427
          %s429 = sand.u32 %s37, 1
          %s430 = smul.addr %s429, 8
          %s431 = scalar_lea.vmem [#allocation2], %s430
          %433 = vsyncadd %s428, 0
          %s434 = smul.addr %s27, 8
          %s435 = scalar_lea.hbm %s0, %s434
          %s437 = sshll.u32 %s435, 4
          %s438 = int_to_ptr.hbm [resolvable:$true] %s437
          %s439 = sshll.u32 %s431, 4
          %s440 = int_to_ptr.vmem [resolvable:$true] %s439
          %442 = dma.hbm_to_vmem [thread:$0]  %s438, 128, %s440, %s428
        $region64: #{tpu_custom_call.1} parent=59 // pred_fallthru
          _
      $region60: #{tpu_custom_call.1} parent=5 // pred_fallthru
        _
      %p443 = scmp.le.s32.totalorder 1, %s27
      %p444 = scmp.lt.s32.totalorder %s27, 3
      %p445 = pnand %p443, %p444
      %p446 = pneg %p445
      // Predicated region
      $region65: #{tpu_custom_call.1} parent=5 // pred_check
        _
      $region66: #{tpu_custom_call.1} parent=5 // pred_check_branch
        %448 = sbr.rel (%p445) target = $region68
      $region67: #{tpu_custom_call.1} parent=5 // pred_region
        %s449 = ssub.s32 %s27, 1
        %s450 = sand.u32 %s40, 1
        %s451 = scalar_lea.sflag [#allocation3], %s450
        %s452 = sand.u32 %s40, 1
        %s453 = smul.addr %s452, 8
        %s454 = scalar_lea.vmem [#allocation2], %s453
        // Predicated region
        $region69: #{tpu_custom_call.1} parent=67 // pred_check
          %p455 = pneg %p53
        $region70: #{tpu_custom_call.1} parent=67 // pred_check_branch
          %457 = sbr.rel (%p455) target = $region72
        $region71: #{tpu_custom_call.1} parent=67 // pred_region
          %459 = dma.done %s451, 128
        $region72: #{tpu_custom_call.1} parent=67 // pred_fallthru
          _
        // Predicated region
        $region73: #{tpu_custom_call.1} parent=67 // pred_check
          %p460 = pneg %p95
        $region74: #{tpu_custom_call.1} parent=67 // pred_check_branch
          %462 = sbr.rel (%p460) target = $region76
        $region75: #{tpu_custom_call.1} parent=67 // pred_region
          %464 = dma.done [#allocation6], 512
        $region76: #{tpu_custom_call.1} parent=67 // pred_fallthru
          _
        // Predicated region
        $region77: #{tpu_custom_call.1} parent=67 // pred_check
          %p465 = pneg %p137
        $region78: #{tpu_custom_call.1} parent=67 // pred_check_branch
          %467 = sbr.rel (%p465) target = $region80
        $region79: #{tpu_custom_call.1} parent=67 // pred_region
          %469 = dma.done [#allocation6], 512
        $region80: #{tpu_custom_call.1} parent=67 // pred_fallthru
          _
        // Predicated region
        $region81: #{tpu_custom_call.1} parent=67 // pred_check
          %p470 = pneg %p158
        $region82: #{tpu_custom_call.1} parent=67 // pred_check_branch
          %472 = sbr.rel (%p470) target = $region84
        $region83: #{tpu_custom_call.1} parent=67 // pred_region
          %474 = dma.done [#allocation9], 128
        $region84: #{tpu_custom_call.1} parent=67 // pred_fallthru
          _
        // Predicated region
        $region85: #{tpu_custom_call.1} parent=67 // pred_check
          %p475 = pneg %p179
        $region86: #{tpu_custom_call.1} parent=67 // pred_check_branch
          %477 = sbr.rel (%p475) target = $region88
        $region87: #{tpu_custom_call.1} parent=67 // pred_region
          %479 = dma.done [#allocation9], 128
        $region88: #{tpu_custom_call.1} parent=67 // pred_fallthru
          _
        // Predicated region
        $region89: #{tpu_custom_call.1} parent=67 // pred_check
          %p480 = pneg %p200
        $region90: #{tpu_custom_call.1} parent=67 // pred_check_branch
          %482 = sbr.rel (%p480) target = $region92
        $region91: #{tpu_custom_call.1} parent=67 // pred_region
          %484 = dma.done [#allocation12], 512
        $region92: #{tpu_custom_call.1} parent=67 // pred_fallthru
          _
        // Predicated region
        $region93: #{tpu_custom_call.1} parent=67 // pred_check
          %p485 = pneg %p242
        $region94: #{tpu_custom_call.1} parent=67 // pred_check_branch
          %487 = sbr.rel (%p485) target = $region96
        $region95: #{tpu_custom_call.1} parent=67 // pred_region
          %489 = dma.done [#allocation12], 512
        $region96: #{tpu_custom_call.1} parent=67 // pred_fallthru
          _
        %s490 = sand.u32 %s40, 1
        %s491 = scalar_lea.sflag [#allocation3], %s490
        %s492 = sand.u32 %s40, 1
        %s493 = smul.addr %s492, 8
        %s494 = scalar_lea.vmem [#allocation2], %s493
        %p495 = pneg %p53
        %p496 = pneg %p50
        %p497 = pneg %p74
        %p498 = pneg %p71
        %p499 = pneg %p95
        %p500 = pneg %p92
        %p501 = pneg %p116
        %p502 = pneg %p113
        %p503 = pneg %p137
        %p504 = pneg %p134
        %p505 = pneg %p158
        %p506 = pneg %p155
        %p507 = pneg %p179
        %p508 = pneg %p176
        %p509 = pneg %p200
        %p510 = pneg %p197
        %p511 = pneg %p221
        %p512 = pneg %p218
        %p513 = pneg %p242
        %p514 = pneg %p239
        %p515 = pneg %p263
        %p516 = pneg %p260
        %p517 = pneg %p284
        %p518 = pneg %p281
        %p519 = pneg %p310
        %p520 = pneg %p307
        %s521 = sand.u32 %s297, 1
        %s522 = scalar_lea.sflag [#allocation4], %s521
        %s523 = sand.u32 %s297, 1
        %s524 = smul.addr %s523, 8
        %s525 = scalar_lea.vmem [#allocation14], %s524
        %v526 = vld [vmem:[%s454] sm:$0xff]
        %v527 = vld [vmem:[%s1] sm:$0xff]
        %vm528 = vcmask 64512
        %v530 = vsel %vm528, %v527, 0
        %532 = vmatpush.msra.mxu0 0.0
        %533 = vmatpush.msra.mxu0 0.0
        %534 = vmatpush.msra.mxu0 0.0
        %535 = vmatpush.msra.mxu0 0.0
        %536 = vmatpush.msra.mxu0 0.0
        %537 = vmatpush.msra.mxu0 0.0
        %538 = vmatpush.msra.mxu0 0.0
        %539 = vmatpush.msra.mxu0 0.0
        %540 = vmatpush.msra.mxu0 0.0
        %541 = vmatpush.msra.mxu0 0.0
        %542 = vmatpush.msra.mxu0 0.0
        %543 = vmatpush.msra.mxu0 0.0
        %544 = vmatpush.msra.mxu0 0.0
        %545 = vmatpush.msra.mxu0 0.0
        %546 = vmatpush.msra.mxu0 0.0
        %547 = vmatpush.msra.mxu0 %v526
        %548 = vmatmul.f32.gmra.mxu0 %v530
        %v549 = vpop.f32.mrf.mxu0
        %v550 = vadd.f32 0.0, %v549
        %551 = vdwg.mxu0
        %v552 = vlaneseq
        %v553 = vand.u32 %v552, 127
        %vm554 = vcmp.lt.s32.totalorder %v553, 16
        %v555 = vsel %vm554, %v550, %v526
        %v556 = vld [vmem:[#allocation5] sm:$0xff]
        %v557 = vld [vmem:[#allocation5 + $0x8] sm:$0xff]
        %v558 = vld [vmem:[#allocation5 + $0x10] sm:$0xff]
        %v559 = vld [vmem:[#allocation5 + $0x18] sm:$0xff]
        %v560 = vld [vmem:[%s3] sm:$0x1]
        %v562 = vperm.slane %v560, 0
        %vm564 = vcmask 261120
        %v566 = vsel %vm564, %v555, 0
        %568 = vmatpush.msra.mxu0 0.0
        %569 = vmatpush.msra.mxu0 0.0
        %570 = vmatpush.msra.mxu0 0.0
        %571 = vmatpush.msra.mxu0 0.0
        %572 = vmatpush.msra.mxu0 0.0
        %573 = vmatpush.msra.mxu0 0.0
        %574 = vmatpush.msra.mxu0 0.0
        %575 = vmatpush.msra.mxu0 0.0
        %576 = vmatpush.msra.mxu0 0.0
        %577 = vmatpush.msra.mxu0 0.0
        %578 = vmatpush.msra.mxu0 0.0
        %579 = vmatpush.msra.mxu0 0.0
        %580 = vmatpush.msra.mxu0 %v559
        %581 = vmatpush.msra.mxu0 %v558
        %582 = vmatpush.msra.mxu0 %v557
        %583 = vmatpush.msra.mxu0 %v556
        %584 = vmatmul.f32.gmra.mxu0 %v566
        %v585 = vpop.f32.mrf.mxu0
        %v586 = vadd.f32 %v562, %v585
        %587 = vdwg.mxu0
        %v588 = vld [vmem:[#allocation8] sm:$0xff]
        %v589 = vld [vmem:[#allocation10] sm:$0xff]
        %v590 = vld [vmem:[#allocation7] sm:$0xff]
        %v591 = vld [vmem:[#allocation7 + $0x8] sm:$0xff]
        %v592 = vld [vmem:[#allocation7 + $0x10] sm:$0xff]
        %v593 = vld [vmem:[#allocation7 + $0x18] sm:$0xff]
        %v594 = vmul.f32 %v586, %v588
        %v596 = vsel %vm564, %v586, 0
        %598 = vmatpush.msra.mxu0 0.0
        %599 = vmatpush.msra.mxu0 0.0
        %600 = vmatpush.msra.mxu0 0.0
        %601 = vmatpush.msra.mxu0 0.0
        %602 = vmatpush.msra.mxu0 0.0
        %603 = vmatpush.msra.mxu0 0.0
        %604 = vmatpush.msra.mxu0 0.0
        %605 = vmatpush.msra.mxu0 0.0
        %606 = vmatpush.msra.mxu0 0.0
        %607 = vmatpush.msra.mxu0 0.0
        %608 = vmatpush.msra.mxu0 0.0
        %609 = vmatpush.msra.mxu0 0.0
        %610 = vmatpush.msra.mxu0 %v593
        %611 = vmatpush.msra.mxu0 %v592
        %612 = vmatpush.msra.mxu0 %v591
        %613 = vmatpush.msra.mxu0 %v590
        %614 = vmatmul.f32.gmra.mxu0 %v596
        %v615 = vpop.f32.mrf.mxu0
        %v616 = vadd.f32 0.0, %v615
        %617 = vdwg.mxu0
        %v618 = vmul.f32 %v616, %v589
        %v619 = vadd.f32 %v594, %v618
        %621 = vrot.lane.b32.xlu0 %v588, 32
        %v622 = vpop.permute.xlu0 %621
        %v624 = vmul.f32 %v586, %v622
        %625 = vrot.lane.b32.xlu0 %v586, 96
        %v626 = vpop.permute.xlu0 %625
        %v627 = vsel %vm564, %v626, 0
        %629 = vmatpush.msra.mxu0 0.0
        %630 = vmatpush.msra.mxu0 0.0
        %631 = vmatpush.msra.mxu0 0.0
        %632 = vmatpush.msra.mxu0 0.0
        %633 = vmatpush.msra.mxu0 0.0
        %634 = vmatpush.msra.mxu0 0.0
        %635 = vmatpush.msra.mxu0 0.0
        %636 = vmatpush.msra.mxu0 0.0
        %637 = vmatpush.msra.mxu0 0.0
        %638 = vmatpush.msra.mxu0 0.0
        %639 = vmatpush.msra.mxu0 0.0
        %640 = vmatpush.msra.mxu0 0.0
        %641 = vmatpush.msra.mxu0 %v593
        %642 = vmatpush.msra.mxu0 %v592
        %643 = vmatpush.msra.mxu0 %v591
        %644 = vmatpush.msra.mxu0 %v590
        %645 = vmatmul.f32.gmra.mxu0 %v627
        %v646 = vpop.f32.mrf.mxu0
        %v647 = vadd.f32 0.0, %v646
        %648 = vdwg.mxu0
        %v649 = vmul.f32 %v647, %v589
        %651 = vrot.lane.b32.xlu0 %v649, 32
        %v652 = vpop.permute.xlu0 %651
        %v654 = vadd.f32 %v624, %v652
        %v655 = vlaneseq
        %v656 = vshrl.u32 %v655, 7
        %vm657 = vcmp.ge.s32.totalorder %v656, %v553
        %659 = vrot.lane.b32.xlu0 %v654, 96
        %v660 = vpop.permute.xlu0 %659
        %v662 = vsel %vm528, %v619, 0
        %v664 = vsel %vm528, %v660, 0
        %666 = vmatpush.xpose.msra.mxu0 0.0
        %667 = vmatpush.xpose.msra.mxu0 0.0
        %668 = vmatpush.xpose.msra.mxu0 0.0
        %669 = vmatpush.xpose.msra.mxu0 0.0
        %670 = vmatpush.xpose.msra.mxu0 0.0
        %671 = vmatpush.xpose.msra.mxu0 0.0
        %672 = vmatpush.xpose.msra.mxu0 0.0
        %673 = vmatpush.xpose.msra.mxu0 0.0
        %674 = vmatpush.xpose.msra.mxu0 0.0
        %675 = vmatpush.xpose.msra.mxu0 0.0
        %676 = vmatpush.xpose.msra.mxu0 0.0
        %677 = vmatpush.xpose.msra.mxu0 0.0
        %678 = vmatpush.xpose.msra.mxu0 0.0
        %679 = vmatpush.xpose.msra.mxu0 0.0
        %680 = vmatpush.xpose.msra.mxu0 0.0
        %681 = vmatpush.xpose.msra.mxu0 %v664
        %682 = vmatmul.f32.gmra.mxu0 %v662
        %v683 = vpop.f32.mrf.mxu0
        %v684 = vadd.f32 0.0, %v683
        %685 = vdwg.mxu0
        %v686 = vmul.f32 %v684, 0.35355338
        %v687 = vsel %vm657, %v686, -1e+30
        %v688 = vsel %vm528, %v687, -inf
        %689 = vmax.xlane.f32.xlu0 %v688
        %v690 = vpop.xlane.xlu0 %689
        %v691 = vsub.f32 %v687, %v690
        %v692 = vmul.f32 %v691, 1.442695
        %v693 = vpow.pop %v692
        %v694 = vsel %vm528, %v693, 0.0
        %695 = vadd.xlane.f32.xlu0 %v694
        %v696 = vpop.xlane.xlu0 %695
        %v697 = vrcp.pop %v696
        %v698 = vmul.f32 %v696, %v697
        %v699 = vsub.f32 1.0, %v698
        %v700 = vmul.f32 %v697, %v699
        %v701 = vadd.f32 %v697, %v700
        %vm702 = vweird.f32 %v696
        %vm703 = vweird.f32 %v697
        %vm704 = vmor %vm702, %vm703
        %v705 = vsel %vm704, %v697, %v701
        %v706 = vand.u32 2147483647, %v696
        %vm707 = vcmp.eq.f32.partialorder %v706, 8.507059e+37
        %v708 = vand.u32 %v696, 2147483648
        %v709 = vor.u32 1.1754944e-38, %v708
        %v710 = vsel %vm707, %v709, %v705
        %v711 = vmul.f32 %v693, %v710
        %v712 = vld [vmem:[#allocation11] sm:$0xff]
        %v713 = vmul.f32 %v711, %v712
        %714 = vrot.lane.b32.xlu0 %v619, 120
        %v715 = vpop.permute.xlu0 %714
        %716 = vrot.lane.b32.xlu0 %v654, 88
        %v717 = vpop.permute.xlu0 %716
        %v718 = vsel %vm528, %v715, 0
        %v720 = vsel %vm528, %v717, 0
        %722 = vmatpush.xpose.msra.mxu0 0.0
        %723 = vmatpush.xpose.msra.mxu0 0.0
        %724 = vmatpush.xpose.msra.mxu0 0.0
        %725 = vmatpush.xpose.msra.mxu0 0.0
        %726 = vmatpush.xpose.msra.mxu0 0.0
        %727 = vmatpush.xpose.msra.mxu0 0.0
        %728 = vmatpush.xpose.msra.mxu0 0.0
        %729 = vmatpush.xpose.msra.mxu0 0.0
        %730 = vmatpush.xpose.msra.mxu0 0.0
        %731 = vmatpush.xpose.msra.mxu0 0.0
        %732 = vmatpush.xpose.msra.mxu0 0.0
        %733 = vmatpush.xpose.msra.mxu0 0.0
        %734 = vmatpush.xpose.msra.mxu0 0.0
        %735 = vmatpush.xpose.msra.mxu0 0.0
        %736 = vmatpush.xpose.msra.mxu0 0.0
        %737 = vmatpush.xpose.msra.mxu0 %v720
        %738 = vmatmul.f32.gmra.mxu0 %v718
        %v739 = vpop.f32.mrf.mxu0
        %v740 = vadd.f32 0.0, %v739
        %741 = vdwg.mxu0
        %v742 = vmul.f32 %v740, 0.35355338
        %v743 = vsel %vm657, %v742, -1e+30
        %v744 = vsel %vm528, %v743, -inf
        %745 = vmax.xlane.f32.xlu0 %v744
        %v746 = vpop.xlane.xlu0 %745
        %v747 = vsub.f32 %v743, %v746
        %v748 = vmul.f32 %v747, 1.442695
        %v749 = vpow.pop %v748
        %v750 = vsel %vm528, %v749, 0.0
        %751 = vadd.xlane.f32.xlu0 %v750
        %v752 = vpop.xlane.xlu0 %751
        %v753 = vrcp.pop %v752
        %v754 = vmul.f32 %v752, %v753
        %v755 = vsub.f32 1.0, %v754
        %v756 = vmul.f32 %v753, %v755
        %v757 = vadd.f32 %v753, %v756
        %vm758 = vweird.f32 %v752
        %vm759 = vweird.f32 %v753
        %vm760 = vmor %vm758, %vm759
        %v761 = vsel %vm760, %v753, %v757
        %v762 = vand.u32 2147483647, %v752
        %vm763 = vcmp.eq.f32.partialorder %v762, 8.507059e+37
        %v764 = vand.u32 %v752, 2147483648
        %v765 = vor.u32 1.1754944e-38, %v764
        %v766 = vsel %vm763, %v765, %v761
        %v767 = vmul.f32 %v749, %v766
        %s768 = scalar_lea.vmem [#allocation11], 8
        %v769 = vld [vmem:[%s768] sm:$0xff]
        %v770 = vmul.f32 %v767, %v769
        %771 = vrot.lane.b32.xlu0 %v619, 112
        %v772 = vpop.permute.xlu0 %771
        %773 = vrot.lane.b32.xlu0 %v654, 80
        %v774 = vpop.permute.xlu0 %773
        %v775 = vsel %vm528, %v772, 0
        %v777 = vsel %vm528, %v774, 0
        %779 = vmatpush.xpose.msra.mxu0 0.0
        %780 = vmatpush.xpose.msra.mxu0 0.0
        %781 = vmatpush.xpose.msra.mxu0 0.0
        %782 = vmatpush.xpose.msra.mxu0 0.0
        %783 = vmatpush.xpose.msra.mxu0 0.0
        %784 = vmatpush.xpose.msra.mxu0 0.0
        %785 = vmatpush.xpose.msra.mxu0 0.0
        %786 = vmatpush.xpose.msra.mxu0 0.0
        %787 = vmatpush.xpose.msra.mxu0 0.0
        %788 = vmatpush.xpose.msra.mxu0 0.0
        %789 = vmatpush.xpose.msra.mxu0 0.0
        %790 = vmatpush.xpose.msra.mxu0 0.0
        %791 = vmatpush.xpose.msra.mxu0 0.0
        %792 = vmatpush.xpose.msra.mxu0 0.0
        %793 = vmatpush.xpose.msra.mxu0 0.0
        %794 = vmatpush.xpose.msra.mxu0 %v777
        %795 = vmatmul.f32.gmra.mxu0 %v775
        %v796 = vpop.f32.mrf.mxu0
        %v797 = vadd.f32 0.0, %v796
        %798 = vdwg.mxu0
        %v799 = vmul.f32 %v797, 0.35355338
        %v800 = vsel %vm657, %v799, -1e+30
        %v801 = vsel %vm528, %v800, -inf
        %802 = vmax.xlane.f32.xlu0 %v801
        %v803 = vpop.xlane.xlu0 %802
        %v804 = vsub.f32 %v800, %v803
        %v805 = vmul.f32 %v804, 1.442695
        %v806 = vpow.pop %v805
        %v807 = vsel %vm528, %v806, 0.0
        %808 = vadd.xlane.f32.xlu0 %v807
        %v809 = vpop.xlane.xlu0 %808
        %v810 = vrcp.pop %v809
        %v811 = vmul.f32 %v809, %v810
        %v812 = vsub.f32 1.0, %v811
        %v813 = vmul.f32 %v810, %v812
        %v814 = vadd.f32 %v810, %v813
        %vm815 = vweird.f32 %v809
        %vm816 = vweird.f32 %v810
        %vm817 = vmor %vm815, %vm816
        %v818 = vsel %vm817, %v810, %v814
        %v819 = vand.u32 2147483647, %v809
        %vm820 = vcmp.eq.f32.partialorder %v819, 8.507059e+37
        %v821 = vand.u32 %v809, 2147483648
        %v822 = vor.u32 1.1754944e-38, %v821
        %v823 = vsel %vm820, %v822, %v818
        %v824 = vmul.f32 %v806, %v823
        %s825 = scalar_lea.vmem [#allocation11], 16
        %v826 = vld [vmem:[%s825] sm:$0xff]
        %v827 = vmul.f32 %v824, %v826
        %828 = vrot.lane.b32.xlu0 %v619, 104
        %v829 = vpop.permute.xlu0 %828
        %830 = vrot.lane.b32.xlu0 %v654, 72
        %v831 = vpop.permute.xlu0 %830
        %v832 = vsel %vm528, %v829, 0
        %v834 = vsel %vm528, %v831, 0
        %836 = vmatpush.xpose.msra.mxu0 0.0
        %837 = vmatpush.xpose.msra.mxu0 0.0
        %838 = vmatpush.xpose.msra.mxu0 0.0
        %839 = vmatpush.xpose.msra.mxu0 0.0
        %840 = vmatpush.xpose.msra.mxu0 0.0
        %841 = vmatpush.xpose.msra.mxu0 0.0
        %842 = vmatpush.xpose.msra.mxu0 0.0
        %843 = vmatpush.xpose.msra.mxu0 0.0
        %844 = vmatpush.xpose.msra.mxu0 0.0
        %845 = vmatpush.xpose.msra.mxu0 0.0
        %846 = vmatpush.xpose.msra.mxu0 0.0
        %847 = vmatpush.xpose.msra.mxu0 0.0
        %848 = vmatpush.xpose.msra.mxu0 0.0
        %849 = vmatpush.xpose.msra.mxu0 0.0
        %850 = vmatpush.xpose.msra.mxu0 0.0
        %851 = vmatpush.xpose.msra.mxu0 %v834
        %852 = vmatmul.f32.gmra.mxu0 %v832
        %v853 = vpop.f32.mrf.mxu0
        %v854 = vadd.f32 0.0, %v853
        %855 = vdwg.mxu0
        %v856 = vmul.f32 %v854, 0.35355338
        %v857 = vsel %vm657, %v856, -1e+30
        %v858 = vsel %vm528, %v857, -inf
        %859 = vmax.xlane.f32.xlu0 %v858
        %v860 = vpop.xlane.xlu0 %859
        %v861 = vsub.f32 %v857, %v860
        %v862 = vmul.f32 %v861, 1.442695
        %v863 = vpow.pop %v862
        %v864 = vsel %vm528, %v863, 0.0
        %865 = vadd.xlane.f32.xlu0 %v864
        %v866 = vpop.xlane.xlu0 %865
        %v867 = vrcp.pop %v866
        %v868 = vmul.f32 %v866, %v867
        %v869 = vsub.f32 1.0, %v868
        %v870 = vmul.f32 %v867, %v869
        %v871 = vadd.f32 %v867, %v870
        %vm872 = vweird.f32 %v866
        %vm873 = vweird.f32 %v867
        %vm874 = vmor %vm872, %vm873
        %v875 = vsel %vm874, %v867, %v871
        %v876 = vand.u32 2147483647, %v866
        %vm877 = vcmp.eq.f32.partialorder %v876, 8.507059e+37
        %v878 = vand.u32 %v866, 2147483648
        %v879 = vor.u32 1.1754944e-38, %v878
        %v880 = vsel %vm877, %v879, %v875
        %v881 = vmul.f32 %v863, %v880
        %s882 = scalar_lea.vmem [#allocation11], 24
        %v883 = vld [vmem:[%s882] sm:$0xff]
        %v884 = vmul.f32 %v881, %v883
        %v885 = vld [vmem:[%s8] sm:$0xf]
        %s887 = vtos %v885
        %v888 = vstv %s887
        %v890 = vmul.f32 %v713, %v888
        %891 = vrot.lane.b32.xlu0 %v885, 127
        %v892 = vpop.permute.xlu0 %891
        %s893 = vtos %v892
        %v894 = vstv %s893
        %v896 = vmul.f32 %v770, %v894
        %v897 = vadd.f32 %v890, %v896
        %898 = vrot.lane.b32.xlu0 %v885, 126
        %v899 = vpop.permute.xlu0 %898
        %s900 = vtos %v899
        %v901 = vstv %s900
        %v903 = vmul.f32 %v827, %v901
        %v904 = vadd.f32 %v897, %v903
        %905 = vrot.lane.b32.xlu0 %v885, 125
        %v906 = vpop.permute.xlu0 %905
        %s907 = vtos %v906
        %v908 = vstv %s907
        %v910 = vmul.f32 %v884, %v908
        %v911 = vadd.f32 %v904, %v910
        %912 = vrot.lane.b32.xlu0 %v586, 64
        %v913 = vpop.permute.xlu0 %912
        %v916 = vsel %vm528, %v911, 0
        %918 = vmatpush.msra.mxu0 0.0
        %919 = vmatpush.msra.mxu0 0.0
        %920 = vmatpush.msra.mxu0 0.0
        %921 = vmatpush.msra.mxu0 0.0
        %922 = vmatpush.msra.mxu0 0.0
        %923 = vmatpush.msra.mxu0 0.0
        %924 = vmatpush.msra.mxu0 0.0
        %925 = vmatpush.msra.mxu0 0.0
        %926 = vmatpush.msra.mxu0 0.0
        %927 = vmatpush.msra.mxu0 0.0
        %928 = vmatpush.msra.mxu0 0.0
        %929 = vmatpush.msra.mxu0 0.0
        %930 = vmatpush.msra.mxu0 0.0
        %931 = vmatpush.msra.mxu0 0.0
        %932 = vmatpush.msra.mxu0 0.0
        %933 = vmatpush.msra.mxu0 %v913
        %934 = vmatmul.f32.gmra.mxu0 %v916
        %v935 = vpop.f32.mrf.mxu0
        %v936 = vadd.f32 0.0, %v935
        %937 = vdwg.mxu0
        %v938 = vrot.slane %v885, 1
        %s939 = vtos %v938
        %v940 = vstv %s939
        %v942 = vmul.f32 %v713, %v940
        %943 = vrot.lane.b32.xlu0 %v938, 127
        %v944 = vpop.permute.xlu0 %943
        %s945 = vtos %v944
        %v946 = vstv %s945
        %v948 = vmul.f32 %v770, %v946
        %v949 = vadd.f32 %v942, %v948
        %950 = vrot.lane.b32.xlu0 %v938, 126
        %v951 = vpop.permute.xlu0 %950
        %s952 = vtos %v951
        %v953 = vstv %s952
        %v955 = vmul.f32 %v827, %v953
        %v956 = vadd.f32 %v949, %v955
        %957 = vrot.lane.b32.xlu0 %v938, 125
        %v958 = vpop.permute.xlu0 %957
        %s959 = vtos %v958
        %v960 = vstv %s959
        %v962 = vmul.f32 %v884, %v960
        %v963 = vadd.f32 %v956, %v962
        %964 = vrot.lane.b32.xlu0 %v586, 56
        %v965 = vpop.permute.xlu0 %964
        %v968 = vsel %vm528, %v963, 0
        %970 = vmatpush.msra.mxu0 0.0
        %971 = vmatpush.msra.mxu0 0.0
        %972 = vmatpush.msra.mxu0 0.0
        %973 = vmatpush.msra.mxu0 0.0
        %974 = vmatpush.msra.mxu0 0.0
        %975 = vmatpush.msra.mxu0 0.0
        %976 = vmatpush.msra.mxu0 0.0
        %977 = vmatpush.msra.mxu0 0.0
        %978 = vmatpush.msra.mxu0 0.0
        %979 = vmatpush.msra.mxu0 0.0
        %980 = vmatpush.msra.mxu0 0.0
        %981 = vmatpush.msra.mxu0 0.0
        %982 = vmatpush.msra.mxu0 0.0
        %983 = vmatpush.msra.mxu0 0.0
        %984 = vmatpush.msra.mxu0 0.0
        %985 = vmatpush.msra.mxu0 %v965
        %986 = vmatmul.f32.gmra.mxu0 %v968
        %v987 = vpop.f32.mrf.mxu0
        %v988 = vadd.f32 0.0, %v987
        %989 = vdwg.mxu0
        %v990 = vrot.slane %v885, 2
        %s991 = vtos %v990
        %v992 = vstv %s991
        %v994 = vmul.f32 %v713, %v992
        %995 = vrot.lane.b32.xlu0 %v990, 127
        %v996 = vpop.permute.xlu0 %995
        %s997 = vtos %v996
        %v998 = vstv %s997
        %v1000 = vmul.f32 %v770, %v998
        %v1001 = vadd.f32 %v994, %v1000
        %1002 = vrot.lane.b32.xlu0 %v990, 126
        %v1003 = vpop.permute.xlu0 %1002
        %s1004 = vtos %v1003
        %v1005 = vstv %s1004
        %v1007 = vmul.f32 %v827, %v1005
        %v1008 = vadd.f32 %v1001, %v1007
        %1009 = vrot.lane.b32.xlu0 %v990, 125
        %v1010 = vpop.permute.xlu0 %1009
        %s1011 = vtos %v1010
        %v1012 = vstv %s1011
        %v1014 = vmul.f32 %v884, %v1012
        %v1015 = vadd.f32 %v1008, %v1014
        %1016 = vrot.lane.b32.xlu0 %v586, 48
        %v1017 = vpop.permute.xlu0 %1016
        %v1020 = vsel %vm528, %v1015, 0
        %1022 = vmatpush.msra.mxu0 0.0
        %1023 = vmatpush.msra.mxu0 0.0
        %1024 = vmatpush.msra.mxu0 0.0
        %1025 = vmatpush.msra.mxu0 0.0
        %1026 = vmatpush.msra.mxu0 0.0
        %1027 = vmatpush.msra.mxu0 0.0
        %1028 = vmatpush.msra.mxu0 0.0
        %1029 = vmatpush.msra.mxu0 0.0
        %1030 = vmatpush.msra.mxu0 0.0
        %1031 = vmatpush.msra.mxu0 0.0
        %1032 = vmatpush.msra.mxu0 0.0
        %1033 = vmatpush.msra.mxu0 0.0
        %1034 = vmatpush.msra.mxu0 0.0
        %1035 = vmatpush.msra.mxu0 0.0
        %1036 = vmatpush.msra.mxu0 0.0
        %1037 = vmatpush.msra.mxu0 %v1017
        %1038 = vmatmul.f32.gmra.mxu0 %v1020
        %v1039 = vpop.f32.mrf.mxu0
        %v1040 = vadd.f32 0.0, %v1039
        %1041 = vdwg.mxu0
        %v1042 = vrot.slane %v885, 3
        %s1043 = vtos %v1042
        %v1044 = vstv %s1043
        %v1046 = vmul.f32 %v713, %v1044
        %1047 = vrot.lane.b32.xlu0 %v1042, 127
        %v1048 = vpop.permute.xlu0 %1047
        %s1049 = vtos %v1048
        %v1050 = vstv %s1049
        %v1052 = vmul.f32 %v770, %v1050
        %v1053 = vadd.f32 %v1046, %v1052
        %1054 = vrot.lane.b32.xlu0 %v1042, 126
        %v1055 = vpop.permute.xlu0 %1054
        %s1056 = vtos %v1055
        %v1057 = vstv %s1056
        %v1059 = vmul.f32 %v827, %v1057
        %v1060 = vadd.f32 %v1053, %v1059
        %1061 = vrot.lane.b32.xlu0 %v1042, 125
        %v1062 = vpop.permute.xlu0 %1061
        %s1063 = vtos %v1062
        %v1064 = vstv %s1063
        %v1066 = vmul.f32 %v884, %v1064
        %v1067 = vadd.f32 %v1060, %v1066
        %1068 = vrot.lane.b32.xlu0 %v586, 40
        %v1069 = vpop.permute.xlu0 %1068
        %v1072 = vsel %vm528, %v1067, 0
        %1074 = vmatpush.msra.mxu0 0.0
        %1075 = vmatpush.msra.mxu0 0.0
        %1076 = vmatpush.msra.mxu0 0.0
        %1077 = vmatpush.msra.mxu0 0.0
        %1078 = vmatpush.msra.mxu0 0.0
        %1079 = vmatpush.msra.mxu0 0.0
        %1080 = vmatpush.msra.mxu0 0.0
        %1081 = vmatpush.msra.mxu0 0.0
        %1082 = vmatpush.msra.mxu0 0.0
        %1083 = vmatpush.msra.mxu0 0.0
        %1084 = vmatpush.msra.mxu0 0.0
        %1085 = vmatpush.msra.mxu0 0.0
        %1086 = vmatpush.msra.mxu0 0.0
        %1087 = vmatpush.msra.mxu0 0.0
        %1088 = vmatpush.msra.mxu0 0.0
        %1089 = vmatpush.msra.mxu0 %v1069
        %1090 = vmatmul.f32.gmra.mxu0 %v1072
        %v1091 = vpop.f32.mrf.mxu0
        %v1092 = vadd.f32 0.0, %v1091
        %1093 = vdwg.mxu0
        %1095 = vrot.lane.b32.xlu0 %v988, 8
        %v1096 = vpop.permute.xlu0 %1095
        %1099 = vrot.lane.b32.xlu0 %v1040, 16
        %v1100 = vpop.permute.xlu0 %1099
        %1103 = vrot.lane.b32.xlu0 %v1092, 24
        %v1104 = vpop.permute.xlu0 %1103
        %v1106 = vsel %vm528, %v936, %v1096
        %vm1107 = vcmask 130048
        %v1108 = vsel %vm1107, %v1106, %v1100
        %vm1109 = vcmask 195584
        %v1110 = vsel %vm1109, %v1108, %v1104
        %v1111 = vld [vmem:[#allocation13] sm:$0xff]
        %v1112 = vld [vmem:[#allocation13 + $0x8] sm:$0xff]
        %v1113 = vld [vmem:[#allocation13 + $0x10] sm:$0xff]
        %v1114 = vld [vmem:[#allocation13 + $0x18] sm:$0xff]
        %v1115 = vld [vmem:[%s10] sm:$0x1]
        %v1117 = vperm.slane %v1115, 0
        %v1120 = vsel %vm564, %v1110, 0
        %1122 = vmatpush.msra.mxu0 0.0
        %1123 = vmatpush.msra.mxu0 0.0
        %1124 = vmatpush.msra.mxu0 0.0
        %1125 = vmatpush.msra.mxu0 0.0
        %1126 = vmatpush.msra.mxu0 0.0
        %1127 = vmatpush.msra.mxu0 0.0
        %1128 = vmatpush.msra.mxu0 0.0
        %1129 = vmatpush.msra.mxu0 0.0
        %1130 = vmatpush.msra.mxu0 0.0
        %1131 = vmatpush.msra.mxu0 0.0
        %1132 = vmatpush.msra.mxu0 0.0
        %1133 = vmatpush.msra.mxu0 0.0
        %1134 = vmatpush.msra.mxu0 %v1114
        %1135 = vmatpush.msra.mxu0 %v1113
        %1136 = vmatpush.msra.mxu0 %v1112
        %1137 = vmatpush.msra.mxu0 %v1111
        %1138 = vmatmul.f32.gmra.mxu0 %v1120
        %v1139 = vpop.f32.mrf.mxu0
        %v1140 = vadd.f32 %v1117, %v1139
        %1141 = vdwg.mxu0
        %v1142 = vld [vmem:[%s11] sm:$0xff]
        %1144 = vset.pattern.permute.xlu0 0
        %1145 = vperm.xlu0 %1144, %v1142
        %v1146 = vpop.permute.xlu0 %1145
        %v1148 = vmul.f32 %v1140, %v1146
        %1149 = vst.msk [vmem:[%s525] sm:$0xff] %vm564, %v1148
        %s1150 = sand.u32 %s297, 1
        %s1151 = scalar_lea.sflag [#allocation4], %s1150
        %s1152 = sand.u32 %s297, 1
        %s1153 = smul.addr %s1152, 8
        %s1154 = scalar_lea.vmem [#allocation14], %s1153
        // Predicated region
        $region97: #{tpu_custom_call.1} parent=67 // pred_check
          %p1155 = pneg %p307
        $region98: #{tpu_custom_call.1} parent=67 // pred_check_branch
          %1157 = sbr.rel (%p1155) target = $region100
        $region99: #{tpu_custom_call.1} parent=67 // pred_region
          %1159 = vsyncadd %s1151, 0
          %s1160 = smul.addr %s32, 8
          %s1161 = scalar_lea.hbm %s12, %s1160
          %s1163 = sshll.u32 %s1154, 4
          %s1164 = int_to_ptr.vmem [resolvable:$true] %s1163
          %s1165 = sshll.u32 %s1161, 4
          %s1166 = int_to_ptr.hbm [resolvable:$true] %s1165
          %1168 = dma.vmem_to_hbm [thread:$0]  %s1164, 128, %s1166, %s1151
        $region100: #{tpu_custom_call.1} parent=67 // pred_fallthru
          _
      $region68: #{tpu_custom_call.1} parent=5 // pred_fallthru
        _
      %p1169 = scmp.le.s32.totalorder 2, %s27
      // Predicated region
      $region101: #{tpu_custom_call.1} parent=5 // pred_check
        %p1170 = pneg %p1169
      $region102: #{tpu_custom_call.1} parent=5 // pred_check_branch
        %1172 = sbr.rel (%p1170) target = $region104
      $region103: #{tpu_custom_call.1} parent=5 // pred_region
        %s1173 = ssub.s32 %s27, 2
        // Predicated region
        $region105: #{tpu_custom_call.1} parent=103 // pred_check
          %p1174 = pneg %p313
        $region106: #{tpu_custom_call.1} parent=103 // pred_check_branch
          %1176 = sbr.rel (%p1174) target = $region108
        $region107: #{tpu_custom_call.1} parent=103 // pred_region
          %s1177 = sand.u32 %s298, 1
          %s1178 = scalar_lea.sflag [#allocation4], %s1177
          %s1179 = sand.u32 %s298, 1
          %s1180 = smul.addr %s1179, 8
          %s1181 = scalar_lea.vmem [#allocation14], %s1180
          %1183 = dma.done %s1178, 128
        $region108: #{tpu_custom_call.1} parent=103 // pred_fallthru
          _
      $region104: #{tpu_custom_call.1} parent=5 // pred_fallthru
        _
    $region6: #{tpu_custom_call.1} parent=1 // loop_footer
      %s31 = sadd.s32 1, %s27
    $region7: #{tpu_custom_call.1} parent=1 // loop_footer_branch
      %26 = sbr.rel target = $region3
    $region8: #{tpu_custom_call.1} parent=1 // loop_exit
      _
    %1184 = vsyncpa [#allocation3], 1
    %s1185 = scalar_lea.sflag [#allocation3], 1
    %1186 = vsyncpa %s1185, 1
    %1187 = vsyncpa [#allocation6], 1
    %1188 = vsyncpa [#allocation9], 1
    %1189 = vsyncpa [#allocation12], 1
    %1190 = vsyncpa [#allocation4], 1
    %s1191 = scalar_lea.sflag [#allocation4], 1
    %1192 = vsyncpa %s1191, 1

</llo_original>
